<compile_context>
chip_gen: v7x
topology: tpu7x:2x2x1
jax: 0.10.0
libtpu: 0.0.40
codegen_flags: <defaults>
</compile_context>

<pallas_src>
import numpy as np

import jax
import jax.numpy as jnp
from jax.experimental import pallas as pl
from jax.experimental.pallas import tpu as pltpu


def make_fused_egnn_kernel(num_layers, fanout, kb_list, hidden_dim, num_class):
    """Fused forward kernel for a fixed NodeFlow structure.

    kb_list[i]   : static number of edges (fanout * n_dst) in block i
    hidden_dim   : H (node_hidden_dim)
    num_class    : C
    """

    def kernel(h_ref, idx_ref, e_ref, w_ref, b_ref, o_ref):
        H, C = hidden_dim, num_class
        A = e_ref.shape[2]                                 # edge_in_dim

        h = h_ref[...]                                     # (N0, D0) f32, VMEM-resident
        for i in range(num_layers):                        # static unroll
            KB = kb_list[i]
            N, D = h.shape                                 # static at trace time
            B = KB // fanout

            # ---- in-kernel neighbour gather: one-hot @ h (MXU) --------------
            idx = idx_ref[i, :KB, :]                       # (KB, 1) int32
            lane_ids = jax.lax.broadcasted_iota(jnp.int32, (KB, N), 1)
            onehot = (idx == lane_ids).astype(jnp.float32)  # consumed immediately by dot
            h_src = jnp.dot(onehot, h, preferred_element_type=jnp.float32)  # (KB, D)

            # ---- message: sum_a e_a * (h_src @ w_a)  (no lane-concat) --------
            e = e_ref[i, :KB, :]                           # (KB, A)
            acc = jnp.broadcast_to(b_ref[i, :, :H], (KB, H))
            for a in range(A):
                wa = w_ref[i, a * D:(a + 1) * D, :H]       # (D, H) static slice
                acc = acc + e[:, a:a + 1] * jnp.dot(
                    h_src, wa, preferred_element_type=jnp.float32)
            m = jnp.maximum(acc, 0.0)                      # relu(message), (KB, H)

            # ---- reduce: mailbox mean over the fanout axis (k-major rows) ---
            hn = m[0:B, :]
            for k in range(1, fanout):
                hn = hn + m[k * B:(k + 1) * B, :]
            h = hn * (1.0 / fanout)                        # (B, H)
            # post-mean ReLU omitted: mean of ReLU'd messages is already >= 0

        # ---- final fc ----------------------------------------------------
        wf = w_ref[num_layers, :H, :C]                     # (H, C)
        bf = b_ref[num_layers, :, :C]                      # (1, C)
        out = jnp.dot(h, wf, preferred_element_type=jnp.float32) + bf
        o_ref[...] = out.astype(o_ref.dtype)

    return kernel


def _full_spec(shape):
    nd = len(shape)
    return pl.BlockSpec(shape, lambda *_: (0,) * nd)


def _pack_inputs(kernel_blocks, params):
    """Host-side, one-time packing of per-layer tensors into a few padded slabs."""
    L = len(kernel_blocks)
    A = int(kernel_blocks[0][1].shape[1])
    kb_list = [int(idx.shape[0]) for idx, _ in kernel_blocks]
    kb_max = max(kb_list)
    H = int(params["node_layers"][0][0].shape[1])
    wf, bf = params["fc"]
    C = int(wf.shape[1])
    ad_max = max(max(int(w.shape[0]) for w, _ in params["node_layers"]), H)
    h_max = max(H, C)

    idx_all = np.zeros((L, kb_max, 1), np.int32)
    e_all = np.zeros((L, kb_max, A), np.float32)
    w_all = np.zeros((L + 1, ad_max, h_max), np.float32)
    b_all = np.zeros((L + 1, 1, h_max), np.float32)

    for i, ((idx, e), (w, b)) in enumerate(zip(kernel_blocks, params["node_layers"])):
        kb = int(idx.shape[0])
        idx_all[i, :kb, :] = np.asarray(idx, np.int32)
        e_all[i, :kb, :] = np.asarray(e, np.float32)
        w_all[i, :w.shape[0], :w.shape[1]] = np.asarray(w, np.float32)
        b_all[i, :, :b.shape[1]] = np.asarray(b, np.float32)
    w_all[L, :H, :C] = np.asarray(wf, np.float32)
    b_all[L, :, :C] = np.asarray(bf, np.float32)

    return idx_all, e_all, w_all, b_all, kb_list, H, C


def minibatch_egnn_forward(node_features, kernel_blocks, params, *, fanout):
    """Fused forward.

    kernel_blocks[i] = (src_idx_flat (K*B_i, 1) int32, edge_feats_flat (K*B_i, A))
    params["node_layers"][i] = (w (A*D_i, H), b (1, H)) ; params["fc"] = (wf (H, C), bf (1, C))
    """
    num_layers = len(kernel_blocks)
    idx_all, e_all, w_all, b_all, kb_list, H, C = _pack_inputs(kernel_blocks, params)
    kernel = make_fused_egnn_kernel(num_layers, fanout, kb_list, H, C)

    n_out = kb_list[-1] // fanout

    inputs = [node_features, idx_all, e_all, w_all, b_all]
    in_specs = [_full_spec(np.shape(a)) for a in inputs]

    return pl.pallas_call(
        kernel,
        out_shape=jax.ShapeDtypeStruct((n_out, C), jnp.float32),
        grid=(1,),
        in_specs=in_specs,
        out_specs=_full_spec((n_out, C)),
        compiler_params=pltpu.CompilerParams(dimension_semantics=("arbitrary",)),
    )(*inputs)


def reference_forward(node_features, blocks, params):
    """Pure-JAX reference mirroring the PyTorch message/reduce semantics."""
    h = node_features
    for (src_idx, e), (w, b) in zip(blocks, params["node_layers"]):
        hs = h[src_idx]                                  # (K, B, D)
        x = e[..., :, None] * hs[..., None, :]           # (K, B, A, D)
        K, B, A, D = x.shape
        m = jax.nn.relu(x.reshape(K, B, A * D) @ w + b)  # (K, B, H)
        h = jax.nn.relu(jnp.mean(m, axis=0))             # (B, H)
    wf, bf = params["fc"]
    return h @ wf + bf


if __name__ == "__main__":
    node_in_dim, node_hidden_dim, edge_in_dim = 16, 32, 4
    num_class, num_layers, fanout = 8, 2, 4
    seeds = 8
    # NodeFlow layer sizes (layer num_layers = seed / output nodes): [128, 32, 8]
    layer_sizes = [seeds * fanout ** (num_layers - i) for i in range(num_layers + 1)]

    key = jax.random.PRNGKey(0)
    keys = jax.random.split(key, 16)

    node_features = jax.random.normal(
        keys[0], (layer_sizes[0], node_in_dim), jnp.float32)

    # Fixed-fanout sampled blocks: src indices + edge features per block.
    blocks = []          # NodeFlow-style layout for the reference
    kernel_blocks = []   # pre-flattened layout consumed by the fused kernel
    for i in range(num_layers):
        n_src, n_dst = layer_sizes[i], layer_sizes[i + 1]
        src_idx = jax.random.randint(keys[1 + 2 * i], (fanout, n_dst), 0, n_src)
        e = jax.random.normal(keys[2 + 2 * i], (fanout, n_dst, edge_in_dim),
                              jnp.float32)
        blocks.append((src_idx, e))
        kernel_blocks.append((
            src_idx.reshape(fanout * n_dst, 1).astype(jnp.int32),
            e.reshape(fanout * n_dst, edge_in_dim),
        ))

    # Deterministic parameter init (shapes from MiniBatchEGNNTrain.__init__),
    # pre-reshaped for the kernel: w -> (A*D, H) == Linear(A*D, H).weight.T,
    # biases -> (1, H)/(1, C).
    params = {"node_layers": [], "fc": None}
    d_in = node_in_dim
    for i in range(num_layers):
        w = 0.1 * jax.random.normal(
            keys[8 + i], (edge_in_dim * d_in, node_hidden_dim), jnp.float32)
        b = 0.1 * jax.random.normal(keys[10 + i], (1, node_hidden_dim), jnp.float32)
        params["node_layers"].append((w, b))
        d_in = node_hidden_dim
    wf = 0.1 * jax.random.normal(keys[12], (node_hidden_dim, num_class), jnp.float32)
    bf = 0.1 * jax.random.normal(keys[13], (1, num_class), jnp.float32)
    params["fc"] = (wf, bf)

    out = minibatch_egnn_forward(node_features, kernel_blocks, params, fanout=fanout)
    out = jax.block_until_ready(out)

    ref = reference_forward(node_features, blocks, params)
    assert out.shape == (seeds, num_class), out.shape
    assert jnp.allclose(out, ref, atol=1e-4, rtol=1e-4), float(
        jnp.max(jnp.abs(out - ref)))
    print("KERNEL_OK")
</pallas_src>

<mosaic_0001>
module attributes {stable_mosaic.version = 11 : i64} {
  func.func @kernel(%arg0: i32, %arg1: memref<128x16xf32, #tpu.memory_space<vmem>>, %arg2: memref<2x128x1xi32, #tpu.memory_space<vmem>>, %arg3: memref<2x128x4xf32, #tpu.memory_space<vmem>>, %arg4: memref<3x128x32xf32, #tpu.memory_space<vmem>>, %arg5: memref<3x1x32xf32, #tpu.memory_space<vmem>>, %arg6: memref<8x8xf32, #tpu.memory_space<vmem>>) attributes {dimension_semantics = [#tpu.dimension_semantics<arbitrary>], iteration_bounds = array<i64: 1>, scalar_prefetch = 0 : i64, scratch_operands = 0 : i64, tpu.core_type = #tpu.core_type<tc>, window_params = [{pipeline_mode = #tpu.pipeline_mode<synchronous>, transform_indices = @transform_0, window_bounds = array<i64: 128, 16>}, {pipeline_mode = #tpu.pipeline_mode<synchronous>, transform_indices = @transform_1, window_bounds = array<i64: 2, 128, 1>}, {pipeline_mode = #tpu.pipeline_mode<synchronous>, transform_indices = @transform_2, window_bounds = array<i64: 2, 128, 4>}, {pipeline_mode = #tpu.pipeline_mode<synchronous>, transform_indices = @transform_3, window_bounds = array<i64: 3, 128, 32>}, {pipeline_mode = #tpu.pipeline_mode<synchronous>, transform_indices = @transform_4, window_bounds = array<i64: 3, 1, 32>}, {pipeline_mode = #tpu.pipeline_mode<synchronous>, transform_indices = @transform_5, window_bounds = array<i64: 8, 8>}]} {
    %c0 = arith.constant 0 : index
    %c0_0 = arith.constant 0 : index
    %0 = vector.load %arg1[%c0, %c0_0] : memref<128x16xf32, #tpu.memory_space<vmem>>, vector<128x16xf32>
    %c0_1 = arith.constant 0 : index
    %c0_2 = arith.constant 0 : index
    %c0_3 = arith.constant 0 : index
    %1 = vector.load %arg2[%c0_1, %c0_2, %c0_3] : memref<2x128x1xi32, #tpu.memory_space<vmem>>, vector<1x128x1xi32>
    %2 = vector.shape_cast %1 : vector<1x128x1xi32> to vector<128x1xi32>
    %3 = tpu.iota {dimensions = array<i32: 1>} : vector<128x128xi32>
    %4 = vector.broadcast %2 : vector<128x1xi32> to vector<128x128xi32>
    %5 = arith.cmpi eq, %4, %3 : vector<128x128xi32>
    %6 = arith.extui %5 : vector<128x128xi1> to vector<128x128xi32>
    %7 = arith.sitofp %6 : vector<128x128xi32> to vector<128x128xf32>
    %cst = arith.constant dense<0.000000e+00> : vector<128x16xf32>
    %8 = tpu.matmul %7, %0, %cst {dimension_numbers = #tpu.dot_dimension_numbers<[1], [0], [0], [1], [0, 0, 1, 1], [], []>} : vector<128x128xf32>, vector<128x16xf32>, vector<128x16xf32> -> vector<128x16xf32>
    %c0_4 = arith.constant 0 : index
    %c0_5 = arith.constant 0 : index
    %c0_6 = arith.constant 0 : index
    %9 = vector.load %arg3[%c0_4, %c0_5, %c0_6] : memref<2x128x4xf32, #tpu.memory_space<vmem>>, vector<1x128x4xf32>
    %10 = vector.shape_cast %9 : vector<1x128x4xf32> to vector<128x4xf32>
    %c0_7 = arith.constant 0 : index
    %c0_8 = arith.constant 0 : index
    %c0_9 = arith.constant 0 : index
    %11 = vector.load %arg5[%c0_7, %c0_8, %c0_9] : memref<3x1x32xf32, #tpu.memory_space<vmem>>, vector<1x1x32xf32>
    %12 = vector.shape_cast %11 : vector<1x1x32xf32> to vector<1x32xf32>
    %13 = vector.shape_cast %12 : vector<1x32xf32> to vector<1x32xf32>
    %14 = vector.broadcast %13 : vector<1x32xf32> to vector<128x32xf32>
    %c0_10 = arith.constant 0 : index
    %c0_11 = arith.constant 0 : index
    %c0_12 = arith.constant 0 : index
    %15 = vector.load %arg4[%c0_10, %c0_11, %c0_12] : memref<3x128x32xf32, #tpu.memory_space<vmem>>, vector<1x16x32xf32>
    %16 = vector.shape_cast %15 : vector<1x16x32xf32> to vector<16x32xf32>
    %17 = vector.extract_strided_slice %10 {offsets = [0, 0], sizes = [128, 1], strides = [1, 1]} : vector<128x4xf32> to vector<128x1xf32>
    %cst_13 = arith.constant dense<0.000000e+00> : vector<128x32xf32>
    %18 = tpu.matmul %8, %16, %cst_13 {dimension_numbers = #tpu.dot_dimension_numbers<[1], [0], [0], [1], [0, 0, 1, 1], [], []>} : vector<128x16xf32>, vector<16x32xf32>, vector<128x32xf32> -> vector<128x32xf32>
    %19 = vector.broadcast %17 : vector<128x1xf32> to vector<128x32xf32>
    %20 = arith.mulf %19, %18 : vector<128x32xf32>
    %21 = arith.addf %14, %20 : vector<128x32xf32>
    %c0_14 = arith.constant 0 : index
    %c16 = arith.constant 16 : index
    %c0_15 = arith.constant 0 : index
    %22 = vector.load %arg4[%c0_14, %c16, %c0_15] : memref<3x128x32xf32, #tpu.memory_space<vmem>>, vector<1x16x32xf32>
    %23 = vector.shape_cast %22 : vector<1x16x32xf32> to vector<16x32xf32>
    %24 = vector.extract_strided_slice %10 {offsets = [0, 1], sizes = [128, 1], strides = [1, 1]} : vector<128x4xf32> to vector<128x1xf32>
    %cst_16 = arith.constant dense<0.000000e+00> : vector<128x32xf32>
    %25 = tpu.matmul %8, %23, %cst_16 {dimension_numbers = #tpu.dot_dimension_numbers<[1], [0], [0], [1], [0, 0, 1, 1], [], []>} : vector<128x16xf32>, vector<16x32xf32>, vector<128x32xf32> -> vector<128x32xf32>
    %26 = vector.broadcast %24 : vector<128x1xf32> to vector<128x32xf32>
    %27 = arith.mulf %26, %25 : vector<128x32xf32>
    %28 = arith.addf %21, %27 : vector<128x32xf32>
    %c0_17 = arith.constant 0 : index
    %c32 = arith.constant 32 : index
    %c0_18 = arith.constant 0 : index
    %29 = vector.load %arg4[%c0_17, %c32, %c0_18] : memref<3x128x32xf32, #tpu.memory_space<vmem>>, vector<1x16x32xf32>
    %30 = vector.shape_cast %29 : vector<1x16x32xf32> to vector<16x32xf32>
    %31 = vector.extract_strided_slice %10 {offsets = [0, 2], sizes = [128, 1], strides = [1, 1]} : vector<128x4xf32> to vector<128x1xf32>
    %cst_19 = arith.constant dense<0.000000e+00> : vector<128x32xf32>
    %32 = tpu.matmul %8, %30, %cst_19 {dimension_numbers = #tpu.dot_dimension_numbers<[1], [0], [0], [1], [0, 0, 1, 1], [], []>} : vector<128x16xf32>, vector<16x32xf32>, vector<128x32xf32> -> vector<128x32xf32>
    %33 = vector.broadcast %31 : vector<128x1xf32> to vector<128x32xf32>
    %34 = arith.mulf %33, %32 : vector<128x32xf32>
    %35 = arith.addf %28, %34 : vector<128x32xf32>
    %c0_20 = arith.constant 0 : index
    %c48 = arith.constant 48 : index
    %c0_21 = arith.constant 0 : index
    %36 = vector.load %arg4[%c0_20, %c48, %c0_21] : memref<3x128x32xf32, #tpu.memory_space<vmem>>, vector<1x16x32xf32>
    %37 = vector.shape_cast %36 : vector<1x16x32xf32> to vector<16x32xf32>
    %38 = vector.extract_strided_slice %10 {offsets = [0, 3], sizes = [128, 1], strides = [1, 1]} : vector<128x4xf32> to vector<128x1xf32>
    %cst_22 = arith.constant dense<0.000000e+00> : vector<128x32xf32>
    %39 = tpu.matmul %8, %37, %cst_22 {dimension_numbers = #tpu.dot_dimension_numbers<[1], [0], [0], [1], [0, 0, 1, 1], [], []>} : vector<128x16xf32>, vector<16x32xf32>, vector<128x32xf32> -> vector<128x32xf32>
    %40 = vector.broadcast %38 : vector<128x1xf32> to vector<128x32xf32>
    %41 = arith.mulf %40, %39 : vector<128x32xf32>
    %42 = arith.addf %35, %41 : vector<128x32xf32>
    %cst_23 = arith.constant 0.000000e+00 : f32
    %43 = vector.broadcast %cst_23 : f32 to vector<128x32xf32>
    %44 = arith.maximumf %42, %43 : vector<128x32xf32>
    %45 = vector.extract_strided_slice %44 {offsets = [0, 0], sizes = [32, 32], strides = [1, 1]} : vector<128x32xf32> to vector<32x32xf32>
    %46 = vector.extract_strided_slice %44 {offsets = [32, 0], sizes = [32, 32], strides = [1, 1]} : vector<128x32xf32> to vector<32x32xf32>
    %47 = arith.addf %45, %46 : vector<32x32xf32>
    %48 = vector.extract_strided_slice %44 {offsets = [64, 0], sizes = [32, 32], strides = [1, 1]} : vector<128x32xf32> to vector<32x32xf32>
    %49 = arith.addf %47, %48 : vector<32x32xf32>
    %50 = vector.extract_strided_slice %44 {offsets = [96, 0], sizes = [32, 32], strides = [1, 1]} : vector<128x32xf32> to vector<32x32xf32>
    %51 = arith.addf %49, %50 : vector<32x32xf32>
    %cst_24 = arith.constant 2.500000e-01 : f32
    %52 = vector.broadcast %cst_24 : f32 to vector<32x32xf32>
    %53 = arith.mulf %51, %52 : vector<32x32xf32>
    %c1 = arith.constant 1 : index
    %c0_25 = arith.constant 0 : index
    %c0_26 = arith.constant 0 : index
    %54 = vector.load %arg2[%c1, %c0_25, %c0_26] : memref<2x128x1xi32, #tpu.memory_space<vmem>>, vector<1x32x1xi32>
    %55 = vector.shape_cast %54 : vector<1x32x1xi32> to vector<32x1xi32>
    %56 = tpu.iota {dimensions = array<i32: 1>} : vector<32x32xi32>
    %57 = vector.broadcast %55 : vector<32x1xi32> to vector<32x32xi32>
    %58 = arith.cmpi eq, %57, %56 : vector<32x32xi32>
    %59 = arith.extui %58 : vector<32x32xi1> to vector<32x32xi32>
    %60 = arith.sitofp %59 : vector<32x32xi32> to vector<32x32xf32>
    %cst_27 = arith.constant dense<0.000000e+00> : vector<32x32xf32>
    %61 = tpu.matmul %60, %53, %cst_27 {dimension_numbers = #tpu.dot_dimension_numbers<[1], [0], [0], [1], [0, 0, 1, 1], [], []>} : vector<32x32xf32>, vector<32x32xf32>, vector<32x32xf32> -> vector<32x32xf32>
    %c1_28 = arith.constant 1 : index
    %c0_29 = arith.constant 0 : index
    %c0_30 = arith.constant 0 : index
    %62 = vector.load %arg3[%c1_28, %c0_29, %c0_30] : memref<2x128x4xf32, #tpu.memory_space<vmem>>, vector<1x32x4xf32>
    %63 = vector.shape_cast %62 : vector<1x32x4xf32> to vector<32x4xf32>
    %c1_31 = arith.constant 1 : index
    %c0_32 = arith.constant 0 : index
    %c0_33 = arith.constant 0 : index
    %64 = vector.load %arg5[%c1_31, %c0_32, %c0_33] : memref<3x1x32xf32, #tpu.memory_space<vmem>>, vector<1x1x32xf32>
    %65 = vector.shape_cast %64 : vector<1x1x32xf32> to vector<1x32xf32>
    %66 = vector.shape_cast %65 : vector<1x32xf32> to vector<1x32xf32>
    %67 = vector.broadcast %66 : vector<1x32xf32> to vector<32x32xf32>
    %c1_34 = arith.constant 1 : index
    %c0_35 = arith.constant 0 : index
    %c0_36 = arith.constant 0 : index
    %68 = vector.load %arg4[%c1_34, %c0_35, %c0_36] : memref<3x128x32xf32, #tpu.memory_space<vmem>>, vector<1x32x32xf32>
    %69 = vector.shape_cast %68 : vector<1x32x32xf32> to vector<32x32xf32>
    %70 = vector.extract_strided_slice %63 {offsets = [0, 0], sizes = [32, 1], strides = [1, 1]} : vector<32x4xf32> to vector<32x1xf32>
    %cst_37 = arith.constant dense<0.000000e+00> : vector<32x32xf32>
    %71 = tpu.matmul %61, %69, %cst_37 {dimension_numbers = #tpu.dot_dimension_numbers<[1], [0], [0], [1], [0, 0, 1, 1], [], []>} : vector<32x32xf32>, vector<32x32xf32>, vector<32x32xf32> -> vector<32x32xf32>
    %72 = vector.broadcast %70 : vector<32x1xf32> to vector<32x32xf32>
    %73 = arith.mulf %72, %71 : vector<32x32xf32>
    %74 = arith.addf %67, %73 : vector<32x32xf32>
    %c1_38 = arith.constant 1 : index
    %c32_39 = arith.constant 32 : index
    %c0_40 = arith.constant 0 : index
    %75 = vector.load %arg4[%c1_38, %c32_39, %c0_40] : memref<3x128x32xf32, #tpu.memory_space<vmem>>, vector<1x32x32xf32>
    %76 = vector.shape_cast %75 : vector<1x32x32xf32> to vector<32x32xf32>
    %77 = vector.extract_strided_slice %63 {offsets = [0, 1], sizes = [32, 1], strides = [1, 1]} : vector<32x4xf32> to vector<32x1xf32>
    %cst_41 = arith.constant dense<0.000000e+00> : vector<32x32xf32>
    %78 = tpu.matmul %61, %76, %cst_41 {dimension_numbers = #tpu.dot_dimension_numbers<[1], [0], [0], [1], [0, 0, 1, 1], [], []>} : vector<32x32xf32>, vector<32x32xf32>, vector<32x32xf32> -> vector<32x32xf32>
    %79 = vector.broadcast %77 : vector<32x1xf32> to vector<32x32xf32>
    %80 = arith.mulf %79, %78 : vector<32x32xf32>
    %81 = arith.addf %74, %80 : vector<32x32xf32>
    %c1_42 = arith.constant 1 : index
    %c64 = arith.constant 64 : index
    %c0_43 = arith.constant 0 : index
    %82 = vector.load %arg4[%c1_42, %c64, %c0_43] : memref<3x128x32xf32, #tpu.memory_space<vmem>>, vector<1x32x32xf32>
    %83 = vector.shape_cast %82 : vector<1x32x32xf32> to vector<32x32xf32>
    %84 = vector.extract_strided_slice %63 {offsets = [0, 2], sizes = [32, 1], strides = [1, 1]} : vector<32x4xf32> to vector<32x1xf32>
    %cst_44 = arith.constant dense<0.000000e+00> : vector<32x32xf32>
    %85 = tpu.matmul %61, %83, %cst_44 {dimension_numbers = #tpu.dot_dimension_numbers<[1], [0], [0], [1], [0, 0, 1, 1], [], []>} : vector<32x32xf32>, vector<32x32xf32>, vector<32x32xf32> -> vector<32x32xf32>
    %86 = vector.broadcast %84 : vector<32x1xf32> to vector<32x32xf32>
    %87 = arith.mulf %86, %85 : vector<32x32xf32>
    %88 = arith.addf %81, %87 : vector<32x32xf32>
    %c1_45 = arith.constant 1 : index
    %c96 = arith.constant 96 : index
    %c0_46 = arith.constant 0 : index
    %89 = vector.load %arg4[%c1_45, %c96, %c0_46] : memref<3x128x32xf32, #tpu.memory_space<vmem>>, vector<1x32x32xf32>
    %90 = vector.shape_cast %89 : vector<1x32x32xf32> to vector<32x32xf32>
    %91 = vector.extract_strided_slice %63 {offsets = [0, 3], sizes = [32, 1], strides = [1, 1]} : vector<32x4xf32> to vector<32x1xf32>
    %cst_47 = arith.constant dense<0.000000e+00> : vector<32x32xf32>
    %92 = tpu.matmul %61, %90, %cst_47 {dimension_numbers = #tpu.dot_dimension_numbers<[1], [0], [0], [1], [0, 0, 1, 1], [], []>} : vector<32x32xf32>, vector<32x32xf32>, vector<32x32xf32> -> vector<32x32xf32>
    %93 = vector.broadcast %91 : vector<32x1xf32> to vector<32x32xf32>
    %94 = arith.mulf %93, %92 : vector<32x32xf32>
    %95 = arith.addf %88, %94 : vector<32x32xf32>
    %cst_48 = arith.constant 0.000000e+00 : f32
    %96 = vector.broadcast %cst_48 : f32 to vector<32x32xf32>
    %97 = arith.maximumf %95, %96 : vector<32x32xf32>
    %98 = vector.extract_strided_slice %97 {offsets = [0, 0], sizes = [8, 32], strides = [1, 1]} : vector<32x32xf32> to vector<8x32xf32>
    %99 = vector.extract_strided_slice %97 {offsets = [8, 0], sizes = [8, 32], strides = [1, 1]} : vector<32x32xf32> to vector<8x32xf32>
    %100 = arith.addf %98, %99 : vector<8x32xf32>
    %101 = vector.extract_strided_slice %97 {offsets = [16, 0], sizes = [8, 32], strides = [1, 1]} : vector<32x32xf32> to vector<8x32xf32>
    %102 = arith.addf %100, %101 : vector<8x32xf32>
    %103 = vector.extract_strided_slice %97 {offsets = [24, 0], sizes = [8, 32], strides = [1, 1]} : vector<32x32xf32> to vector<8x32xf32>
    %104 = arith.addf %102, %103 : vector<8x32xf32>
    %cst_49 = arith.constant 2.500000e-01 : f32
    %105 = vector.broadcast %cst_49 : f32 to vector<8x32xf32>
    %106 = arith.mulf %104, %105 : vector<8x32xf32>
    %c2 = arith.constant 2 : index
    %c0_50 = arith.constant 0 : index
    %c0_51 = arith.constant 0 : index
    %107 = vector.load %arg4[%c2, %c0_50, %c0_51] : memref<3x128x32xf32, #tpu.memory_space<vmem>>, vector<1x32x8xf32>
    %108 = vector.shape_cast %107 : vector<1x32x8xf32> to vector<32x8xf32>
    %c2_52 = arith.constant 2 : index
    %c0_53 = arith.constant 0 : index
    %c0_54 = arith.constant 0 : index
    %109 = vector.load %arg5[%c2_52, %c0_53, %c0_54] : memref<3x1x32xf32, #tpu.memory_space<vmem>>, vector<1x1x8xf32>
    %110 = vector.shape_cast %109 : vector<1x1x8xf32> to vector<1x8xf32>
    %cst_55 = arith.constant dense<0.000000e+00> : vector<8x8xf32>
    %111 = tpu.matmul %106, %108, %cst_55 {dimension_numbers = #tpu.dot_dimension_numbers<[1], [0], [0], [1], [0, 0, 1, 1], [], []>} : vector<8x32xf32>, vector<32x8xf32>, vector<8x8xf32> -> vector<8x8xf32>
    %112 = vector.broadcast %110 : vector<1x8xf32> to vector<8x8xf32>
    %113 = arith.addf %111, %112 : vector<8x8xf32>
    %c0_56 = arith.constant 0 : index
    %c0_57 = arith.constant 0 : index
    %114 = vector.load %arg6[%c0_56, %c0_57] : memref<8x8xf32, #tpu.memory_space<vmem>>, vector<8x8xf32>
    tpu.vector_store %arg6[%c0_56, %c0_57], %113 {strides = array<i32>} : memref<8x8xf32, #tpu.memory_space<vmem>>, vector<8x8xf32>,
    return
  }
  func.func @transform_0(%arg0: i32) -> (i32, i32) {
    %c0_i32 = arith.constant 0 : i32
    %c0_i32_0 = arith.constant 0 : i32
    %c0_i32_1 = arith.constant 0 : i32
    return %c0_i32, %c0_i32_0 : i32, i32
  }
  func.func @transform_1(%arg0: i32) -> (i32, i32, i32) {
    %c0_i32 = arith.constant 0 : i32
    %c0_i32_0 = arith.constant 0 : i32
    %c0_i32_1 = arith.constant 0 : i32
    %c0_i32_2 = arith.constant 0 : i32
    return %c0_i32, %c0_i32_0, %c0_i32_1 : i32, i32, i32
  }
  func.func @transform_2(%arg0: i32) -> (i32, i32, i32) {
    %c0_i32 = arith.constant 0 : i32
    %c0_i32_0 = arith.constant 0 : i32
    %c0_i32_1 = arith.constant 0 : i32
    %c0_i32_2 = arith.constant 0 : i32
    return %c0_i32, %c0_i32_0, %c0_i32_1 : i32, i32, i32
  }
  func.func @transform_3(%arg0: i32) -> (i32, i32, i32) {
    %c0_i32 = arith.constant 0 : i32
    %c0_i32_0 = arith.constant 0 : i32
    %c0_i32_1 = arith.constant 0 : i32
    %c0_i32_2 = arith.constant 0 : i32
    return %c0_i32, %c0_i32_0, %c0_i32_1 : i32, i32, i32
  }
  func.func @transform_4(%arg0: i32) -> (i32, i32, i32) {
    %c0_i32 = arith.constant 0 : i32
    %c0_i32_0 = arith.constant 0 : i32
    %c0_i32_1 = arith.constant 0 : i32
    %c0_i32_2 = arith.constant 0 : i32
    return %c0_i32, %c0_i32_0, %c0_i32_1 : i32, i32, i32
  }
  func.func @transform_5(%arg0: i32) -> (i32, i32) {
    %c0_i32 = arith.constant 0 : i32
    %c0_i32_0 = arith.constant 0 : i32
    %c0_i32_1 = arith.constant 0 : i32
    return %c0_i32, %c0_i32_0 : i32, i32
  }
}

</mosaic_0001>

<llo_original>
// kernel: tpu_custom_call.1
$region0: #{tpu_custom_call.1}
  #allocation0 [shape = 'u32[]', space=smem, size = 0x4, offset = 0x4, fixed_abs, tag = 'smem constant byte address 0x4 - core index']
  #allocation1 [shape = 'u32[144,128]{1,0:T(1,128)}', space=vmem, size = 0x12000, scoped, tag = 'internal scratch']
  %s0 = inlined_call_operand.vmem [shape: f32[128,16], index: 0, kind: input, shape index: {}]
  %s1 = inlined_call_operand.vmem [shape: s32[2,128,1], index: 1, kind: input, shape index: {}]
  %s2 = inlined_call_operand.vmem [shape: f32[2,128,4], index: 2, kind: input, shape index: {}]
  %s3 = inlined_call_operand.vmem [shape: f32[3,128,32], index: 3, kind: input, shape index: {}]
  %s4 = inlined_call_operand.vmem [shape: f32[3,1,32], index: 4, kind: input, shape index: {}]
  %s5 = inlined_call_operand.hbm [shape: f32[8,8], index: 5, kind: output, shape index: {}]
  %s6 = sld [smem:[#allocation0]]
  $region30: #{tpu_custom_call.1} parent=0
    _
  %s8 = ssub.s32 1, %s6
  %s9 = scalar_select 0, %s8, %s6
  $region1: #{tpu_custom_call.1} parent=0
    #allocation2 [shape = 'u8[4096]{0}', space=vmem, size = 0x1000, scoped, tag = 'output window, operand 0, single buffered']
    #allocation3 [shape = 's32[1]{0}', space=sflag, size = 0x4, scoped, tag = 'scoped memory for tpu_custom_call.1']
    %10 = vsyncpa [#allocation3], 0
    // Predicated region
    $region2: #{tpu_custom_call.1} parent=1 // pred_check
      _
    $region3: #{tpu_custom_call.1} parent=1 // pred_check_branch
      %12 = sbr.rel (0) target = $region5
    $region4: #{tpu_custom_call.1} parent=1 // pred_region
      _
    $region5: #{tpu_custom_call.1} parent=1 // pred_fallthru
      _
    // Predicated region
    $region6: #{tpu_custom_call.1} parent=1 // pred_check
      _
    $region7: #{tpu_custom_call.1} parent=1 // pred_check_branch
      %14 = sbr.rel (0) target = $region9
    $region8: #{tpu_custom_call.1} parent=1 // pred_region
      _
    $region9: #{tpu_custom_call.1} parent=1 // pred_fallthru
      _
    // Predicated region
    $region10: #{tpu_custom_call.1} parent=1 // pred_check
      _
    $region11: #{tpu_custom_call.1} parent=1 // pred_check_branch
      %16 = sbr.rel (0) target = $region13
    $region12: #{tpu_custom_call.1} parent=1 // pred_region
      _
    $region13: #{tpu_custom_call.1} parent=1 // pred_fallthru
      _
    // Predicated region
    $region14: #{tpu_custom_call.1} parent=1 // pred_check
      _
    $region15: #{tpu_custom_call.1} parent=1 // pred_check_branch
      %18 = sbr.rel (0) target = $region17
    $region16: #{tpu_custom_call.1} parent=1 // pred_region
      _
    $region17: #{tpu_custom_call.1} parent=1 // pred_fallthru
      _
    // Predicated region
    $region18: #{tpu_custom_call.1} parent=1 // pred_check
      _
    $region19: #{tpu_custom_call.1} parent=1 // pred_check_branch
      %20 = sbr.rel (0) target = $region21
    $region20: #{tpu_custom_call.1} parent=1 // pred_region
      _
    $region21: #{tpu_custom_call.1} parent=1 // pred_fallthru
      _
    %v21 = vld [vmem:[%s0] sm:$0xff]
    %v22 = vld [vmem:[%s0 + $0x8] sm:$0xff]
    %v23 = vld [vmem:[%s0 + $0x10] sm:$0xff]
    %v24 = vld [vmem:[%s0 + $0x18] sm:$0xff]
    %v25 = vld [vmem:[%s0 + $0x20] sm:$0xff]
    %v26 = vld [vmem:[%s0 + $0x28] sm:$0xff]
    %v27 = vld [vmem:[%s0 + $0x30] sm:$0xff]
    %v28 = vld [vmem:[%s0 + $0x38] sm:$0xff]
    %v29 = vld [vmem:[%s0 + $0x40] sm:$0xff]
    %v30 = vld [vmem:[%s0 + $0x48] sm:$0xff]
    %v31 = vld [vmem:[%s0 + $0x50] sm:$0xff]
    %v32 = vld [vmem:[%s0 + $0x58] sm:$0xff]
    %v33 = vld [vmem:[%s0 + $0x60] sm:$0xff]
    %v34 = vld [vmem:[%s0 + $0x68] sm:$0xff]
    %v35 = vld [vmem:[%s0 + $0x70] sm:$0xff]
    %v36 = vld [vmem:[%s0 + $0x78] sm:$0xff]
    %v37 = vld [vmem:[%s1] sm:$0xff]
    %v38 = vld [vmem:[%s1 + $0x8] sm:$0xff]
    %v39 = vld [vmem:[%s1 + $0x10] sm:$0xff]
    %v40 = vld [vmem:[%s1 + $0x18] sm:$0xff]
    %v41 = vld [vmem:[%s1 + $0x20] sm:$0xff]
    %v42 = vld [vmem:[%s1 + $0x28] sm:$0xff]
    %v43 = vld [vmem:[%s1 + $0x30] sm:$0xff]
    %v44 = vld [vmem:[%s1 + $0x38] sm:$0xff]
    %v45 = vld [vmem:[%s1 + $0x40] sm:$0xff]
    %v46 = vld [vmem:[%s1 + $0x48] sm:$0xff]
    %v47 = vld [vmem:[%s1 + $0x50] sm:$0xff]
    %v48 = vld [vmem:[%s1 + $0x58] sm:$0xff]
    %v49 = vld [vmem:[%s1 + $0x60] sm:$0xff]
    %v50 = vld [vmem:[%s1 + $0x68] sm:$0xff]
    %v51 = vld [vmem:[%s1 + $0x70] sm:$0xff]
    %v52 = vld [vmem:[%s1 + $0x78] sm:$0xff]
    %v53 = vlaneseq
    %v54 = vand.u32 %v53, 127
    %55 = vset.pattern.permute.xlu0 0
    %56 = vperm.xlu0 %55, %v37
    %v57 = vpop.permute.xlu0 %56
    %58 = vset.pattern.permute.xlu0 0
    %59 = vperm.xlu0 %58, %v38
    %v60 = vpop.permute.xlu0 %59
    %61 = vset.pattern.permute.xlu0 0
    %62 = vperm.xlu0 %61, %v39
    %v63 = vpop.permute.xlu0 %62
    %64 = vset.pattern.permute.xlu0 0
    %65 = vperm.xlu0 %64, %v40
    %v66 = vpop.permute.xlu0 %65
    %67 = vset.pattern.permute.xlu0 0
    %68 = vperm.xlu0 %67, %v41
    %v69 = vpop.permute.xlu0 %68
    %70 = vset.pattern.permute.xlu0 0
    %71 = vperm.xlu0 %70, %v42
    %v72 = vpop.permute.xlu0 %71
    %73 = vset.pattern.permute.xlu0 0
    %74 = vperm.xlu0 %73, %v43
    %v75 = vpop.permute.xlu0 %74
    %76 = vset.pattern.permute.xlu0 0
    %77 = vperm.xlu0 %76, %v44
    %v78 = vpop.permute.xlu0 %77
    %79 = vset.pattern.permute.xlu0 0
    %80 = vperm.xlu0 %79, %v45
    %v81 = vpop.permute.xlu0 %80
    %82 = vset.pattern.permute.xlu0 0
    %83 = vperm.xlu0 %82, %v46
    %v84 = vpop.permute.xlu0 %83
    %85 = vset.pattern.permute.xlu0 0
    %86 = vperm.xlu0 %85, %v47
    %v87 = vpop.permute.xlu0 %86
    %88 = vset.pattern.permute.xlu0 0
    %89 = vperm.xlu0 %88, %v48
    %v90 = vpop.permute.xlu0 %89
    %91 = vset.pattern.permute.xlu0 0
    %92 = vperm.xlu0 %91, %v49
    %v93 = vpop.permute.xlu0 %92
    %94 = vset.pattern.permute.xlu0 0
    %95 = vperm.xlu0 %94, %v50
    %v96 = vpop.permute.xlu0 %95
    %97 = vset.pattern.permute.xlu0 0
    %98 = vperm.xlu0 %97, %v51
    %v99 = vpop.permute.xlu0 %98
    %100 = vset.pattern.permute.xlu0 0
    %101 = vperm.xlu0 %100, %v52
    %v102 = vpop.permute.xlu0 %101
    %vm103 = vcmp.eq.s32.totalorder %v57, %v54
    %vm104 = vcmp.eq.s32.totalorder %v60, %v54
    %vm105 = vcmp.eq.s32.totalorder %v63, %v54
    %vm106 = vcmp.eq.s32.totalorder %v66, %v54
    %vm107 = vcmp.eq.s32.totalorder %v69, %v54
    %vm108 = vcmp.eq.s32.totalorder %v72, %v54
    %vm109 = vcmp.eq.s32.totalorder %v75, %v54
    %vm110 = vcmp.eq.s32.totalorder %v78, %v54
    %vm111 = vcmp.eq.s32.totalorder %v81, %v54
    %vm112 = vcmp.eq.s32.totalorder %v84, %v54
    %vm113 = vcmp.eq.s32.totalorder %v87, %v54
    %vm114 = vcmp.eq.s32.totalorder %v90, %v54
    %vm115 = vcmp.eq.s32.totalorder %v93, %v54
    %vm116 = vcmp.eq.s32.totalorder %v96, %v54
    %vm117 = vcmp.eq.s32.totalorder %v99, %v54
    %vm118 = vcmp.eq.s32.totalorder %v102, %v54
    %v119 = vsel %vm103, 1, 0
    %v120 = vsel %vm104, 1, 0
    %v121 = vsel %vm105, 1, 0
    %v122 = vsel %vm106, 1, 0
    %v123 = vsel %vm107, 1, 0
    %v124 = vsel %vm108, 1, 0
    %v125 = vsel %vm109, 1, 0
    %v126 = vsel %vm110, 1, 0
    %v127 = vsel %vm111, 1, 0
    %v128 = vsel %vm112, 1, 0
    %v129 = vsel %vm113, 1, 0
    %v130 = vsel %vm114, 1, 0
    %v131 = vsel %vm115, 1, 0
    %v132 = vsel %vm116, 1, 0
    %v133 = vsel %vm117, 1, 0
    %v134 = vsel %vm118, 1, 0
    %v135 = vcvt.s32.f32 %v119
    %v136 = vcvt.s32.f32 %v120
    %v137 = vcvt.s32.f32 %v121
    %v138 = vcvt.s32.f32 %v122
    %v139 = vcvt.s32.f32 %v123
    %v140 = vcvt.s32.f32 %v124
    %v141 = vcvt.s32.f32 %v125
    %v142 = vcvt.s32.f32 %v126
    %v143 = vcvt.s32.f32 %v127
    %v144 = vcvt.s32.f32 %v128
    %v145 = vcvt.s32.f32 %v129
    %v146 = vcvt.s32.f32 %v130
    %v147 = vcvt.s32.f32 %v131
    %v148 = vcvt.s32.f32 %v132
    %v149 = vcvt.s32.f32 %v133
    %v150 = vcvt.s32.f32 %v134
    %151 = vmatprep.subr.mxu0 0.0
    %152 = vmatpush1.msra.mxu0 %v21
    %153 = vmatprep.subr.mxu0 0.0
    %154 = vmatpush1.msra.mxu0 %v22
    %155 = vmatprep.subr.mxu0 0.0
    %156 = vmatpush1.msra.mxu0 %v23
    %157 = vmatprep.subr.mxu0 0.0
    %158 = vmatpush1.msra.mxu0 %v24
    %159 = vmatprep.subr.mxu0 0.0
    %160 = vmatpush1.msra.mxu0 %v25
    %161 = vmatprep.subr.mxu0 0.0
    %162 = vmatpush1.msra.mxu0 %v26
    %163 = vmatprep.subr.mxu0 0.0
    %164 = vmatpush1.msra.mxu0 %v27
    %165 = vmatprep.subr.mxu0 0.0
    %166 = vmatpush1.msra.mxu0 %v28
    %167 = vmatprep.subr.mxu0 0.0
    %168 = vmatpush1.msra.mxu0 %v29
    %169 = vmatprep.subr.mxu0 0.0
    %170 = vmatpush1.msra.mxu0 %v30
    %171 = vmatprep.subr.mxu0 0.0
    %172 = vmatpush1.msra.mxu0 %v31
    %173 = vmatprep.subr.mxu0 0.0
    %174 = vmatpush1.msra.mxu0 %v32
    %175 = vmatprep.subr.mxu0 0.0
    %176 = vmatpush1.msra.mxu0 %v33
    %177 = vmatprep.subr.mxu0 0.0
    %178 = vmatpush1.msra.mxu0 %v34
    %179 = vmatprep.subr.mxu0 0.0
    %180 = vmatpush1.msra.mxu0 %v35
    %181 = vmatprep.subr.mxu0 0.0
    %182 = vmatpush1.msra.mxu0 %v36
    %183 = vmatprep.subr.mxu0 0.0
    %184 = vmatpush1.msra.mxu0 0.0
    %185 = vmatprep.subr.mxu0 0.0
    %186 = vmatpush1.msra.mxu0 0.0
    %187 = vmatprep.subr.mxu0 0.0
    %188 = vmatpush1.msra.mxu0 0.0
    %189 = vmatprep.subr.mxu0 0.0
    %190 = vmatpush1.msra.mxu0 0.0
    %191 = vmatprep.subr.mxu0 0.0
    %192 = vmatpush1.msra.mxu0 0.0
    %193 = vmatprep.subr.mxu0 0.0
    %194 = vmatpush1.msra.mxu0 0.0
    %195 = vmatprep.subr.mxu0 0.0
    %196 = vmatpush1.msra.mxu0 0.0
    %197 = vmatprep.subr.mxu0 0.0
    %198 = vmatpush1.msra.mxu0 0.0
    %199 = vmatprep.subr.mxu0 0.0
    %200 = vmatpush1.msra.mxu0 0.0
    %201 = vmatprep.subr.mxu0 0.0
    %202 = vmatpush1.msra.mxu0 0.0
    %203 = vmatprep.subr.mxu0 0.0
    %204 = vmatpush1.msra.mxu0 0.0
    %205 = vmatprep.subr.mxu0 0.0
    %206 = vmatpush1.msra.mxu0 0.0
    %207 = vmatprep.subr.mxu0 0.0
    %208 = vmatpush1.msra.mxu0 0.0
    %209 = vmatprep.subr.mxu0 0.0
    %210 = vmatpush1.msra.mxu0 0.0
    %211 = vmatprep.subr.mxu0 0.0
    %212 = vmatpush1.msra.mxu0 0.0
    %213 = vmatprep.subr.mxu0 0.0
    %214 = vmatpush1.msra.mxu0 0.0
    %215 = vmatprep.mubr.f32.mxu0 0.0
    %216 = vmatmul.mubr.f32.gmra.mrb[0].mxu0 %v135
    %v217 = vpop.f32.mrb[0].mxu0
    %v218 = vadd.f32 0.0, %v217
    %v219 = vpop.f32.mrb[0].mxu0
    %220 = vmatprep.mubr.f32.mxu0 0.0
    %221 = vmatmul.mubr.f32.gmra.mrb[0].mxu0 %v136
    %v222 = vpop.f32.mrb[0].mxu0
    %v223 = vadd.f32 0.0, %v222
    %v224 = vpop.f32.mrb[0].mxu0
    %225 = vmatprep.mubr.f32.mxu0 0.0
    %226 = vmatmul.mubr.f32.gmra.mrb[0].mxu0 %v137
    %v227 = vpop.f32.mrb[0].mxu0
    %v228 = vadd.f32 0.0, %v227
    %v229 = vpop.f32.mrb[0].mxu0
    %230 = vmatprep.mubr.f32.mxu0 0.0
    %231 = vmatmul.mubr.f32.gmra.mrb[0].mxu0 %v138
    %v232 = vpop.f32.mrb[0].mxu0
    %v233 = vadd.f32 0.0, %v232
    %v234 = vpop.f32.mrb[0].mxu0
    %235 = vmatprep.mubr.f32.mxu0 0.0
    %236 = vmatmul.mubr.f32.gmra.mrb[0].mxu0 %v139
    %v237 = vpop.f32.mrb[0].mxu0
    %v238 = vadd.f32 0.0, %v237
    %v239 = vpop.f32.mrb[0].mxu0
    %240 = vmatprep.mubr.f32.mxu0 0.0
    %241 = vmatmul.mubr.f32.gmra.mrb[0].mxu0 %v140
    %v242 = vpop.f32.mrb[0].mxu0
    %v243 = vadd.f32 0.0, %v242
    %v244 = vpop.f32.mrb[0].mxu0
    %245 = vmatprep.mubr.f32.mxu0 0.0
    %246 = vmatmul.mubr.f32.gmra.mrb[0].mxu0 %v141
    %v247 = vpop.f32.mrb[0].mxu0
    %v248 = vadd.f32 0.0, %v247
    %v249 = vpop.f32.mrb[0].mxu0
    %250 = vmatprep.mubr.f32.mxu0 0.0
    %251 = vmatmul.mubr.f32.gmra.mrb[0].mxu0 %v142
    %v252 = vpop.f32.mrb[0].mxu0
    %v253 = vadd.f32 0.0, %v252
    %v254 = vpop.f32.mrb[0].mxu0
    %255 = vmatprep.mubr.f32.mxu0 0.0
    %256 = vmatmul.mubr.f32.gmra.mrb[0].mxu0 %v143
    %v257 = vpop.f32.mrb[0].mxu0
    %v258 = vadd.f32 0.0, %v257
    %v259 = vpop.f32.mrb[0].mxu0
    %260 = vmatprep.mubr.f32.mxu0 0.0
    %261 = vmatmul.mubr.f32.gmra.mrb[0].mxu0 %v144
    %v262 = vpop.f32.mrb[0].mxu0
    %v263 = vadd.f32 0.0, %v262
    %v264 = vpop.f32.mrb[0].mxu0
    %265 = vmatprep.mubr.f32.mxu0 0.0
    %266 = vmatmul.mubr.f32.gmra.mrb[0].mxu0 %v145
    %v267 = vpop.f32.mrb[0].mxu0
    %v268 = vadd.f32 0.0, %v267
    %v269 = vpop.f32.mrb[0].mxu0
    %270 = vmatprep.mubr.f32.mxu0 0.0
    %271 = vmatmul.mubr.f32.gmra.mrb[0].mxu0 %v146
    %v272 = vpop.f32.mrb[0].mxu0
    %v273 = vadd.f32 0.0, %v272
    %v274 = vpop.f32.mrb[0].mxu0
    %275 = vmatprep.mubr.f32.mxu0 0.0
    %276 = vmatmul.mubr.f32.gmra.mrb[0].mxu0 %v147
    %v277 = vpop.f32.mrb[0].mxu0
    %v278 = vadd.f32 0.0, %v277
    %v279 = vpop.f32.mrb[0].mxu0
    %280 = vmatprep.mubr.f32.mxu0 0.0
    %281 = vmatmul.mubr.f32.gmra.mrb[0].mxu0 %v148
    %v282 = vpop.f32.mrb[0].mxu0
    %v283 = vadd.f32 0.0, %v282
    %v284 = vpop.f32.mrb[0].mxu0
    %285 = vmatprep.mubr.f32.mxu0 0.0
    %286 = vmatmul.mubr.f32.gmra.mrb[0].mxu0 %v149
    %v287 = vpop.f32.mrb[0].mxu0
    %v288 = vadd.f32 0.0, %v287
    %v289 = vpop.f32.mrb[0].mxu0
    %290 = vmatprep.mubr.f32.mxu0 0.0
    %291 = vmatmul.mubr.f32.gmra.mrb[0].mxu0 %v150
    %v292 = vpop.f32.mrb[0].mxu0
    %v293 = vadd.f32 0.0, %v292
    %v294 = vpop.f32.mrb[0].mxu0
    %295 = vdwg.mxu0
    %v296 = vld [vmem:[%s2] sm:$0xff]
    %v297 = vld [vmem:[%s2 + $0x8] sm:$0xff]
    %v298 = vld [vmem:[%s2 + $0x10] sm:$0xff]
    %v299 = vld [vmem:[%s2 + $0x18] sm:$0xff]
    %v300 = vld [vmem:[%s2 + $0x20] sm:$0xff]
    %v301 = vld [vmem:[%s2 + $0x28] sm:$0xff]
    %v302 = vld [vmem:[%s2 + $0x30] sm:$0xff]
    %v303 = vld [vmem:[%s2 + $0x38] sm:$0xff]
    %v304 = vld [vmem:[%s2 + $0x40] sm:$0xff]
    %v305 = vld [vmem:[%s2 + $0x48] sm:$0xff]
    %v306 = vld [vmem:[%s2 + $0x50] sm:$0xff]
    %v307 = vld [vmem:[%s2 + $0x58] sm:$0xff]
    %v308 = vld [vmem:[%s2 + $0x60] sm:$0xff]
    %v309 = vld [vmem:[%s2 + $0x68] sm:$0xff]
    %v310 = vld [vmem:[%s2 + $0x70] sm:$0xff]
    %v311 = vld [vmem:[%s2 + $0x78] sm:$0xff]
    %v312 = vld [vmem:[%s4] sm:$0x1]
    %v314 = vlaneseq
    %v315 = vshrl.u32 %v314, 7
    %v316 = vsub.s32 0, %v315
    %v317 = vrot.slane %v312, %v316
    %v319 = vld [vmem:[%s3] sm:$0xff]
    %v320 = vld [vmem:[%s3 + $0x8] sm:$0xff]
    %vm321 = vcmask 130048
    %v323 = vsel %vm321, %v218, 0
    %v326 = vsel %vm321, %v223, 0
    %v329 = vsel %vm321, %v228, 0
    %v332 = vsel %vm321, %v233, 0
    %v335 = vsel %vm321, %v238, 0
    %v338 = vsel %vm321, %v243, 0
    %v341 = vsel %vm321, %v248, 0
    %v344 = vsel %vm321, %v253, 0
    %v347 = vsel %vm321, %v258, 0
    %v350 = vsel %vm321, %v263, 0
    %v353 = vsel %vm321, %v268, 0
    %v356 = vsel %vm321, %v273, 0
    %v359 = vsel %vm321, %v278, 0
    %v362 = vsel %vm321, %v283, 0
    %v365 = vsel %vm321, %v288, 0
    %v368 = vsel %vm321, %v293, 0
    %370 = vmatprep.subr.mxu0 0.0
    %371 = vmatpush1.msra.mxu0 %v319
    %372 = vmatprep.subr.mxu0 0.0
    %373 = vmatpush1.msra.mxu0 %v320
    %374 = vmatprep.subr.mxu0 0.0
    %375 = vmatpush1.msra.mxu0 0.0
    %376 = vmatprep.subr.mxu0 0.0
    %377 = vmatpush1.msra.mxu0 0.0
    %378 = vmatprep.subr.mxu0 0.0
    %379 = vmatpush1.msra.mxu0 0.0
    %380 = vmatprep.subr.mxu0 0.0
    %381 = vmatpush1.msra.mxu0 0.0
    %382 = vmatprep.subr.mxu0 0.0
    %383 = vmatpush1.msra.mxu0 0.0
    %384 = vmatprep.subr.mxu0 0.0
    %385 = vmatpush1.msra.mxu0 0.0
    %386 = vmatprep.subr.mxu0 0.0
    %387 = vmatpush1.msra.mxu0 0.0
    %388 = vmatprep.subr.mxu0 0.0
    %389 = vmatpush1.msra.mxu0 0.0
    %390 = vmatprep.subr.mxu0 0.0
    %391 = vmatpush1.msra.mxu0 0.0
    %392 = vmatprep.subr.mxu0 0.0
    %393 = vmatpush1.msra.mxu0 0.0
    %394 = vmatprep.subr.mxu0 0.0
    %395 = vmatpush1.msra.mxu0 0.0
    %396 = vmatprep.subr.mxu0 0.0
    %397 = vmatpush1.msra.mxu0 0.0
    %398 = vmatprep.subr.mxu0 0.0
    %399 = vmatpush1.msra.mxu0 0.0
    %400 = vmatprep.subr.mxu0 0.0
    %401 = vmatpush1.msra.mxu0 0.0
    %402 = vmatprep.subr.mxu0 0.0
    %403 = vmatpush1.msra.mxu0 0.0
    %404 = vmatprep.subr.mxu0 0.0
    %405 = vmatpush1.msra.mxu0 0.0
    %406 = vmatprep.subr.mxu0 0.0
    %407 = vmatpush1.msra.mxu0 0.0
    %408 = vmatprep.subr.mxu0 0.0
    %409 = vmatpush1.msra.mxu0 0.0
    %410 = vmatprep.subr.mxu0 0.0
    %411 = vmatpush1.msra.mxu0 0.0
    %412 = vmatprep.subr.mxu0 0.0
    %413 = vmatpush1.msra.mxu0 0.0
    %414 = vmatprep.subr.mxu0 0.0
    %415 = vmatpush1.msra.mxu0 0.0
    %416 = vmatprep.subr.mxu0 0.0
    %417 = vmatpush1.msra.mxu0 0.0
    %418 = vmatprep.subr.mxu0 0.0
    %419 = vmatpush1.msra.mxu0 0.0
    %420 = vmatprep.subr.mxu0 0.0
    %421 = vmatpush1.msra.mxu0 0.0
    %422 = vmatprep.subr.mxu0 0.0
    %423 = vmatpush1.msra.mxu0 0.0
    %424 = vmatprep.subr.mxu0 0.0
    %425 = vmatpush1.msra.mxu0 0.0
    %426 = vmatprep.subr.mxu0 0.0
    %427 = vmatpush1.msra.mxu0 0.0
    %428 = vmatprep.subr.mxu0 0.0
    %429 = vmatpush1.msra.mxu0 0.0
    %430 = vmatprep.subr.mxu0 0.0
    %431 = vmatpush1.msra.mxu0 0.0
    %432 = vmatprep.subr.mxu0 0.0
    %433 = vmatpush1.msra.mxu0 0.0
    %434 = vmatprep.mubr.f32.mxu0 0.0
    %435 = vmatmul.mubr.f32.gmra.mrb[0].mxu0 %v323
    %v436 = vpop.f32.mrb[0].mxu0
    %v437 = vadd.f32 0.0, %v436
    %v438 = vpop.f32.mrb[0].mxu0
    %439 = vmatprep.mubr.f32.mxu0 0.0
    %440 = vmatmul.mubr.f32.gmra.mrb[0].mxu0 %v326
    %v441 = vpop.f32.mrb[0].mxu0
    %v442 = vadd.f32 0.0, %v441
    %v443 = vpop.f32.mrb[0].mxu0
    %444 = vmatprep.mubr.f32.mxu0 0.0
    %445 = vmatmul.mubr.f32.gmra.mrb[0].mxu0 %v329
    %v446 = vpop.f32.mrb[0].mxu0
    %v447 = vadd.f32 0.0, %v446
    %v448 = vpop.f32.mrb[0].mxu0
    %449 = vmatprep.mubr.f32.mxu0 0.0
    %450 = vmatmul.mubr.f32.gmra.mrb[0].mxu0 %v332
    %v451 = vpop.f32.mrb[0].mxu0
    %v452 = vadd.f32 0.0, %v451
    %v453 = vpop.f32.mrb[0].mxu0
    %454 = vmatprep.mubr.f32.mxu0 0.0
    %455 = vmatmul.mubr.f32.gmra.mrb[0].mxu0 %v335
    %v456 = vpop.f32.mrb[0].mxu0
    %v457 = vadd.f32 0.0, %v456
    %v458 = vpop.f32.mrb[0].mxu0
    %459 = vmatprep.mubr.f32.mxu0 0.0
    %460 = vmatmul.mubr.f32.gmra.mrb[0].mxu0 %v338
    %v461 = vpop.f32.mrb[0].mxu0
    %v462 = vadd.f32 0.0, %v461
    %v463 = vpop.f32.mrb[0].mxu0
    %464 = vmatprep.mubr.f32.mxu0 0.0
    %465 = vmatmul.mubr.f32.gmra.mrb[0].mxu0 %v341
    %v466 = vpop.f32.mrb[0].mxu0
    %v467 = vadd.f32 0.0, %v466
    %v468 = vpop.f32.mrb[0].mxu0
    %469 = vmatprep.mubr.f32.mxu0 0.0
    %470 = vmatmul.mubr.f32.gmra.mrb[0].mxu0 %v344
    %v471 = vpop.f32.mrb[0].mxu0
    %v472 = vadd.f32 0.0, %v471
    %v473 = vpop.f32.mrb[0].mxu0
    %474 = vmatprep.mubr.f32.mxu0 0.0
    %475 = vmatmul.mubr.f32.gmra.mrb[0].mxu0 %v347
    %v476 = vpop.f32.mrb[0].mxu0
    %v477 = vadd.f32 0.0, %v476
    %v478 = vpop.f32.mrb[0].mxu0
    %479 = vmatprep.mubr.f32.mxu0 0.0
    %480 = vmatmul.mubr.f32.gmra.mrb[0].mxu0 %v350
    %v481 = vpop.f32.mrb[0].mxu0
    %v482 = vadd.f32 0.0, %v481
    %v483 = vpop.f32.mrb[0].mxu0
    %484 = vmatprep.mubr.f32.mxu0 0.0
    %485 = vmatmul.mubr.f32.gmra.mrb[0].mxu0 %v353
    %v486 = vpop.f32.mrb[0].mxu0
    %v487 = vadd.f32 0.0, %v486
    %v488 = vpop.f32.mrb[0].mxu0
    %489 = vmatprep.mubr.f32.mxu0 0.0
    %490 = vmatmul.mubr.f32.gmra.mrb[0].mxu0 %v356
    %v491 = vpop.f32.mrb[0].mxu0
    %v492 = vadd.f32 0.0, %v491
    %v493 = vpop.f32.mrb[0].mxu0
    %494 = vmatprep.mubr.f32.mxu0 0.0
    %495 = vmatmul.mubr.f32.gmra.mrb[0].mxu0 %v359
    %v496 = vpop.f32.mrb[0].mxu0
    %v497 = vadd.f32 0.0, %v496
    %v498 = vpop.f32.mrb[0].mxu0
    %499 = vmatprep.mubr.f32.mxu0 0.0
    %500 = vmatmul.mubr.f32.gmra.mrb[0].mxu0 %v362
    %v501 = vpop.f32.mrb[0].mxu0
    %v502 = vadd.f32 0.0, %v501
    %v503 = vpop.f32.mrb[0].mxu0
    %504 = vmatprep.mubr.f32.mxu0 0.0
    %505 = vmatmul.mubr.f32.gmra.mrb[0].mxu0 %v365
    %v506 = vpop.f32.mrb[0].mxu0
    %v507 = vadd.f32 0.0, %v506
    %v508 = vpop.f32.mrb[0].mxu0
    %509 = vmatprep.mubr.f32.mxu0 0.0
    %510 = vmatmul.mubr.f32.gmra.mrb[0].mxu0 %v368
    %v511 = vpop.f32.mrb[0].mxu0
    %v512 = vadd.f32 0.0, %v511
    %v513 = vpop.f32.mrb[0].mxu0
    %514 = vdwg.mxu0
    %516 = vset.pattern.permute.xlu0 0
    %517 = vperm.xlu0 %516, %v296
    %v518 = vpop.permute.xlu0 %517
    %521 = vset.pattern.permute.xlu0 0
    %522 = vperm.xlu0 %521, %v297
    %v523 = vpop.permute.xlu0 %522
    %526 = vset.pattern.permute.xlu0 0
    %527 = vperm.xlu0 %526, %v298
    %v528 = vpop.permute.xlu0 %527
    %531 = vset.pattern.permute.xlu0 0
    %532 = vperm.xlu0 %531, %v299
    %v533 = vpop.permute.xlu0 %532
    %536 = vset.pattern.permute.xlu0 0
    %537 = vperm.xlu0 %536, %v300
    %v538 = vpop.permute.xlu0 %537
    %541 = vset.pattern.permute.xlu0 0
    %542 = vperm.xlu0 %541, %v301
    %v543 = vpop.permute.xlu0 %542
    %546 = vset.pattern.permute.xlu0 0
    %547 = vperm.xlu0 %546, %v302
    %v548 = vpop.permute.xlu0 %547
    %551 = vset.pattern.permute.xlu0 0
    %552 = vperm.xlu0 %551, %v303
    %v553 = vpop.permute.xlu0 %552
    %556 = vset.pattern.permute.xlu0 0
    %557 = vperm.xlu0 %556, %v304
    %v558 = vpop.permute.xlu0 %557
    %561 = vset.pattern.permute.xlu0 0
    %562 = vperm.xlu0 %561, %v305
    %v563 = vpop.permute.xlu0 %562
    %566 = vset.pattern.permute.xlu0 0
    %567 = vperm.xlu0 %566, %v306
    %v568 = vpop.permute.xlu0 %567
    %571 = vset.pattern.permute.xlu0 0
    %572 = vperm.xlu0 %571, %v307
    %v573 = vpop.permute.xlu0 %572
    %576 = vset.pattern.permute.xlu0 0
    %577 = vperm.xlu0 %576, %v308
    %v578 = vpop.permute.xlu0 %577
    %581 = vset.pattern.permute.xlu0 0
    %582 = vperm.xlu0 %581, %v309
    %v583 = vpop.permute.xlu0 %582
    %586 = vset.pattern.permute.xlu0 0
    %587 = vperm.xlu0 %586, %v310
    %v588 = vpop.permute.xlu0 %587
    %591 = vset.pattern.permute.xlu0 0
    %592 = vperm.xlu0 %591, %v311
    %v593 = vpop.permute.xlu0 %592
    %v595 = vmul.f32 %v518, %v437
    %v596 = vmul.f32 %v523, %v442
    %v597 = vmul.f32 %v528, %v447
    %v598 = vmul.f32 %v533, %v452
    %v599 = vmul.f32 %v538, %v457
    %v600 = vmul.f32 %v543, %v462
    %v601 = vmul.f32 %v548, %v467
    %v602 = vmul.f32 %v553, %v472
    %v603 = vmul.f32 %v558, %v477
    %v604 = vmul.f32 %v563, %v482
    %v605 = vmul.f32 %v568, %v487
    %v606 = vmul.f32 %v573, %v492
    %v607 = vmul.f32 %v578, %v497
    %v608 = vmul.f32 %v583, %v502
    %v609 = vmul.f32 %v588, %v507
    %v610 = vmul.f32 %v593, %v512
    %v611 = vadd.f32 %v317, %v595
    %v612 = vadd.f32 %v317, %v596
    %v613 = vadd.f32 %v317, %v597
    %v614 = vadd.f32 %v317, %v598
    %v615 = vadd.f32 %v317, %v599
    %v616 = vadd.f32 %v317, %v600
    %v617 = vadd.f32 %v317, %v601
    %v618 = vadd.f32 %v317, %v602
    %v619 = vadd.f32 %v317, %v603
    %v620 = vadd.f32 %v317, %v604
    %v621 = vadd.f32 %v317, %v605
    %v622 = vadd.f32 %v317, %v606
    %v623 = vadd.f32 %v317, %v607
    %v624 = vadd.f32 %v317, %v608
    %v625 = vadd.f32 %v317, %v609
    %v626 = vadd.f32 %v317, %v610
    %v627 = vld [vmem:[%s3 + $0x10] sm:$0xff]
    %v628 = vld [vmem:[%s3 + $0x18] sm:$0xff]
    %629 = vmatprep.subr.mxu0 0.0
    %630 = vmatpush1.msra.mxu0 %v627
    %631 = vmatprep.subr.mxu0 0.0
    %632 = vmatpush1.msra.mxu0 %v628
    %633 = vmatprep.subr.mxu0 0.0
    %634 = vmatpush1.msra.mxu0 0.0
    %635 = vmatprep.subr.mxu0 0.0
    %636 = vmatpush1.msra.mxu0 0.0
    %637 = vmatprep.subr.mxu0 0.0
    %638 = vmatpush1.msra.mxu0 0.0
    %639 = vmatprep.subr.mxu0 0.0
    %640 = vmatpush1.msra.mxu0 0.0
    %641 = vmatprep.subr.mxu0 0.0
    %642 = vmatpush1.msra.mxu0 0.0
    %643 = vmatprep.subr.mxu0 0.0
    %644 = vmatpush1.msra.mxu0 0.0
    %645 = vmatprep.subr.mxu0 0.0
    %646 = vmatpush1.msra.mxu0 0.0
    %647 = vmatprep.subr.mxu0 0.0
    %648 = vmatpush1.msra.mxu0 0.0
    %649 = vmatprep.subr.mxu0 0.0
    %650 = vmatpush1.msra.mxu0 0.0
    %651 = vmatprep.subr.mxu0 0.0
    %652 = vmatpush1.msra.mxu0 0.0
    %653 = vmatprep.subr.mxu0 0.0
    %654 = vmatpush1.msra.mxu0 0.0
    %655 = vmatprep.subr.mxu0 0.0
    %656 = vmatpush1.msra.mxu0 0.0
    %657 = vmatprep.subr.mxu0 0.0
    %658 = vmatpush1.msra.mxu0 0.0
    %659 = vmatprep.subr.mxu0 0.0
    %660 = vmatpush1.msra.mxu0 0.0
    %661 = vmatprep.subr.mxu0 0.0
    %662 = vmatpush1.msra.mxu0 0.0
    %663 = vmatprep.subr.mxu0 0.0
    %664 = vmatpush1.msra.mxu0 0.0
    %665 = vmatprep.subr.mxu0 0.0
    %666 = vmatpush1.msra.mxu0 0.0
    %667 = vmatprep.subr.mxu0 0.0
    %668 = vmatpush1.msra.mxu0 0.0
    %669 = vmatprep.subr.mxu0 0.0
    %670 = vmatpush1.msra.mxu0 0.0
    %671 = vmatprep.subr.mxu0 0.0
    %672 = vmatpush1.msra.mxu0 0.0
    %673 = vmatprep.subr.mxu0 0.0
    %674 = vmatpush1.msra.mxu0 0.0
    %675 = vmatprep.subr.mxu0 0.0
    %676 = vmatpush1.msra.mxu0 0.0
    %677 = vmatprep.subr.mxu0 0.0
    %678 = vmatpush1.msra.mxu0 0.0
    %679 = vmatprep.subr.mxu0 0.0
    %680 = vmatpush1.msra.mxu0 0.0
    %681 = vmatprep.subr.mxu0 0.0
    %682 = vmatpush1.msra.mxu0 0.0
    %683 = vmatprep.subr.mxu0 0.0
    %684 = vmatpush1.msra.mxu0 0.0
    %685 = vmatprep.subr.mxu0 0.0
    %686 = vmatpush1.msra.mxu0 0.0
    %687 = vmatprep.subr.mxu0 0.0
    %688 = vmatpush1.msra.mxu0 0.0
    %689 = vmatprep.subr.mxu0 0.0
    %690 = vmatpush1.msra.mxu0 0.0
    %691 = vmatprep.subr.mxu0 0.0
    %692 = vmatpush1.msra.mxu0 0.0
    %693 = vmatprep.mubr.f32.mxu0 0.0
    %694 = vmatmul.mubr.f32.gmra.mrb[0].mxu0 %v323
    %v695 = vpop.f32.mrb[0].mxu0
    %v696 = vadd.f32 0.0, %v695
    %v697 = vpop.f32.mrb[0].mxu0
    %698 = vmatprep.mubr.f32.mxu0 0.0
    %699 = vmatmul.mubr.f32.gmra.mrb[0].mxu0 %v326
    %v700 = vpop.f32.mrb[0].mxu0
    %v701 = vadd.f32 0.0, %v700
    %v702 = vpop.f32.mrb[0].mxu0
    %703 = vmatprep.mubr.f32.mxu0 0.0
    %704 = vmatmul.mubr.f32.gmra.mrb[0].mxu0 %v329
    %v705 = vpop.f32.mrb[0].mxu0
    %v706 = vadd.f32 0.0, %v705
    %v707 = vpop.f32.mrb[0].mxu0
    %708 = vmatprep.mubr.f32.mxu0 0.0
    %709 = vmatmul.mubr.f32.gmra.mrb[0].mxu0 %v332
    %v710 = vpop.f32.mrb[0].mxu0
    %v711 = vadd.f32 0.0, %v710
    %v712 = vpop.f32.mrb[0].mxu0
    %713 = vmatprep.mubr.f32.mxu0 0.0
    %714 = vmatmul.mubr.f32.gmra.mrb[0].mxu0 %v335
    %v715 = vpop.f32.mrb[0].mxu0
    %v716 = vadd.f32 0.0, %v715
    %v717 = vpop.f32.mrb[0].mxu0
    %718 = vmatprep.mubr.f32.mxu0 0.0
    %719 = vmatmul.mubr.f32.gmra.mrb[0].mxu0 %v338
    %v720 = vpop.f32.mrb[0].mxu0
    %v721 = vadd.f32 0.0, %v720
    %v722 = vpop.f32.mrb[0].mxu0
    %723 = vmatprep.mubr.f32.mxu0 0.0
    %724 = vmatmul.mubr.f32.gmra.mrb[0].mxu0 %v341
    %v725 = vpop.f32.mrb[0].mxu0
    %v726 = vadd.f32 0.0, %v725
    %v727 = vpop.f32.mrb[0].mxu0
    %728 = vmatprep.mubr.f32.mxu0 0.0
    %729 = vmatmul.mubr.f32.gmra.mrb[0].mxu0 %v344
    %v730 = vpop.f32.mrb[0].mxu0
    %v731 = vadd.f32 0.0, %v730
    %v732 = vpop.f32.mrb[0].mxu0
    %733 = vmatprep.mubr.f32.mxu0 0.0
    %734 = vmatmul.mubr.f32.gmra.mrb[0].mxu0 %v347
    %v735 = vpop.f32.mrb[0].mxu0
    %v736 = vadd.f32 0.0, %v735
    %v737 = vpop.f32.mrb[0].mxu0
    %738 = vmatprep.mubr.f32.mxu0 0.0
    %739 = vmatmul.mubr.f32.gmra.mrb[0].mxu0 %v350
    %v740 = vpop.f32.mrb[0].mxu0
    %v741 = vadd.f32 0.0, %v740
    %v742 = vpop.f32.mrb[0].mxu0
    %743 = vmatprep.mubr.f32.mxu0 0.0
    %744 = vmatmul.mubr.f32.gmra.mrb[0].mxu0 %v353
    %v745 = vpop.f32.mrb[0].mxu0
    %v746 = vadd.f32 0.0, %v745
    %v747 = vpop.f32.mrb[0].mxu0
    %748 = vmatprep.mubr.f32.mxu0 0.0
    %749 = vmatmul.mubr.f32.gmra.mrb[0].mxu0 %v356
    %v750 = vpop.f32.mrb[0].mxu0
    %v751 = vadd.f32 0.0, %v750
    %v752 = vpop.f32.mrb[0].mxu0
    %753 = vmatprep.mubr.f32.mxu0 0.0
    %754 = vmatmul.mubr.f32.gmra.mrb[0].mxu0 %v359
    %v755 = vpop.f32.mrb[0].mxu0
    %v756 = vadd.f32 0.0, %v755
    %v757 = vpop.f32.mrb[0].mxu0
    %758 = vmatprep.mubr.f32.mxu0 0.0
    %759 = vmatmul.mubr.f32.gmra.mrb[0].mxu0 %v362
    %v760 = vpop.f32.mrb[0].mxu0
    %v761 = vadd.f32 0.0, %v760
    %v762 = vpop.f32.mrb[0].mxu0
    %763 = vmatprep.mubr.f32.mxu0 0.0
    %764 = vmatmul.mubr.f32.gmra.mrb[0].mxu0 %v365
    %v765 = vpop.f32.mrb[0].mxu0
    %v766 = vadd.f32 0.0, %v765
    %v767 = vpop.f32.mrb[0].mxu0
    %768 = vmatprep.mubr.f32.mxu0 0.0
    %769 = vmatmul.mubr.f32.gmra.mrb[0].mxu0 %v368
    %v770 = vpop.f32.mrb[0].mxu0
    %v771 = vadd.f32 0.0, %v770
    %v772 = vpop.f32.mrb[0].mxu0
    %773 = vdwg.mxu0
    %774 = vset.pattern.permute.xlu0 1
    %775 = vperm.xlu0 %774, %v296
    %v776 = vpop.permute.xlu0 %775
    %778 = vset.pattern.permute.xlu0 1
    %779 = vperm.xlu0 %778, %v297
    %v780 = vpop.permute.xlu0 %779
    %782 = vset.pattern.permute.xlu0 1
    %783 = vperm.xlu0 %782, %v298
    %v784 = vpop.permute.xlu0 %783
    %786 = vset.pattern.permute.xlu0 1
    %787 = vperm.xlu0 %786, %v299
    %v788 = vpop.permute.xlu0 %787
    %790 = vset.pattern.permute.xlu0 1
    %791 = vperm.xlu0 %790, %v300
    %v792 = vpop.permute.xlu0 %791
    %794 = vset.pattern.permute.xlu0 1
    %795 = vperm.xlu0 %794, %v301
    %v796 = vpop.permute.xlu0 %795
    %798 = vset.pattern.permute.xlu0 1
    %799 = vperm.xlu0 %798, %v302
    %v800 = vpop.permute.xlu0 %799
    %802 = vset.pattern.permute.xlu0 1
    %803 = vperm.xlu0 %802, %v303
    %v804 = vpop.permute.xlu0 %803
    %806 = vset.pattern.permute.xlu0 1
    %807 = vperm.xlu0 %806, %v304
    %v808 = vpop.permute.xlu0 %807
    %810 = vset.pattern.permute.xlu0 1
    %811 = vperm.xlu0 %810, %v305
    %v812 = vpop.permute.xlu0 %811
    %814 = vset.pattern.permute.xlu0 1
    %815 = vperm.xlu0 %814, %v306
    %v816 = vpop.permute.xlu0 %815
    %818 = vset.pattern.permute.xlu0 1
    %819 = vperm.xlu0 %818, %v307
    %v820 = vpop.permute.xlu0 %819
    %822 = vset.pattern.permute.xlu0 1
    %823 = vperm.xlu0 %822, %v308
    %v824 = vpop.permute.xlu0 %823
    %826 = vset.pattern.permute.xlu0 1
    %827 = vperm.xlu0 %826, %v309
    %v828 = vpop.permute.xlu0 %827
    %830 = vset.pattern.permute.xlu0 1
    %831 = vperm.xlu0 %830, %v310
    %v832 = vpop.permute.xlu0 %831
    %834 = vset.pattern.permute.xlu0 1
    %835 = vperm.xlu0 %834, %v311
    %v836 = vpop.permute.xlu0 %835
    %v838 = vmul.f32 %v776, %v696
    %v839 = vmul.f32 %v780, %v701
    %v840 = vmul.f32 %v784, %v706
    %v841 = vmul.f32 %v788, %v711
    %v842 = vmul.f32 %v792, %v716
    %v843 = vmul.f32 %v796, %v721
    %v844 = vmul.f32 %v800, %v726
    %v845 = vmul.f32 %v804, %v731
    %v846 = vmul.f32 %v808, %v736
    %v847 = vmul.f32 %v812, %v741
    %v848 = vmul.f32 %v816, %v746
    %v849 = vmul.f32 %v820, %v751
    %v850 = vmul.f32 %v824, %v756
    %v851 = vmul.f32 %v828, %v761
    %v852 = vmul.f32 %v832, %v766
    %v853 = vmul.f32 %v836, %v771
    %v854 = vadd.f32 %v611, %v838
    %v855 = vadd.f32 %v612, %v839
    %v856 = vadd.f32 %v613, %v840
    %v857 = vadd.f32 %v614, %v841
    %v858 = vadd.f32 %v615, %v842
    %v859 = vadd.f32 %v616, %v843
    %v860 = vadd.f32 %v617, %v844
    %v861 = vadd.f32 %v618, %v845
    %v862 = vadd.f32 %v619, %v846
    %v863 = vadd.f32 %v620, %v847
    %v864 = vadd.f32 %v621, %v848
    %v865 = vadd.f32 %v622, %v849
    %v866 = vadd.f32 %v623, %v850
    %v867 = vadd.f32 %v624, %v851
    %v868 = vadd.f32 %v625, %v852
    %v869 = vadd.f32 %v626, %v853
    %v870 = vld [vmem:[%s3 + $0x20] sm:$0xff]
    %v871 = vld [vmem:[%s3 + $0x28] sm:$0xff]
    %872 = vmatprep.subr.mxu0 0.0
    %873 = vmatpush1.msra.mxu0 %v870
    %874 = vmatprep.subr.mxu0 0.0
    %875 = vmatpush1.msra.mxu0 %v871
    %876 = vmatprep.subr.mxu0 0.0
    %877 = vmatpush1.msra.mxu0 0.0
    %878 = vmatprep.subr.mxu0 0.0
    %879 = vmatpush1.msra.mxu0 0.0
    %880 = vmatprep.subr.mxu0 0.0
    %881 = vmatpush1.msra.mxu0 0.0
    %882 = vmatprep.subr.mxu0 0.0
    %883 = vmatpush1.msra.mxu0 0.0
    %884 = vmatprep.subr.mxu0 0.0
    %885 = vmatpush1.msra.mxu0 0.0
    %886 = vmatprep.subr.mxu0 0.0
    %887 = vmatpush1.msra.mxu0 0.0
    %888 = vmatprep.subr.mxu0 0.0
    %889 = vmatpush1.msra.mxu0 0.0
    %890 = vmatprep.subr.mxu0 0.0
    %891 = vmatpush1.msra.mxu0 0.0
    %892 = vmatprep.subr.mxu0 0.0
    %893 = vmatpush1.msra.mxu0 0.0
    %894 = vmatprep.subr.mxu0 0.0
    %895 = vmatpush1.msra.mxu0 0.0
    %896 = vmatprep.subr.mxu0 0.0
    %897 = vmatpush1.msra.mxu0 0.0
    %898 = vmatprep.subr.mxu0 0.0
    %899 = vmatpush1.msra.mxu0 0.0
    %900 = vmatprep.subr.mxu0 0.0
    %901 = vmatpush1.msra.mxu0 0.0
    %902 = vmatprep.subr.mxu0 0.0
    %903 = vmatpush1.msra.mxu0 0.0
    %904 = vmatprep.subr.mxu0 0.0
    %905 = vmatpush1.msra.mxu0 0.0
    %906 = vmatprep.subr.mxu0 0.0
    %907 = vmatpush1.msra.mxu0 0.0
    %908 = vmatprep.subr.mxu0 0.0
    %909 = vmatpush1.msra.mxu0 0.0
    %910 = vmatprep.subr.mxu0 0.0
    %911 = vmatpush1.msra.mxu0 0.0
    %912 = vmatprep.subr.mxu0 0.0
    %913 = vmatpush1.msra.mxu0 0.0
    %914 = vmatprep.subr.mxu0 0.0
    %915 = vmatpush1.msra.mxu0 0.0
    %916 = vmatprep.subr.mxu0 0.0
    %917 = vmatpush1.msra.mxu0 0.0
    %918 = vmatprep.subr.mxu0 0.0
    %919 = vmatpush1.msra.mxu0 0.0
    %920 = vmatprep.subr.mxu0 0.0
    %921 = vmatpush1.msra.mxu0 0.0
    %922 = vmatprep.subr.mxu0 0.0
    %923 = vmatpush1.msra.mxu0 0.0
    %924 = vmatprep.subr.mxu0 0.0
    %925 = vmatpush1.msra.mxu0 0.0
    %926 = vmatprep.subr.mxu0 0.0
    %927 = vmatpush1.msra.mxu0 0.0
    %928 = vmatprep.subr.mxu0 0.0
    %929 = vmatpush1.msra.mxu0 0.0
    %930 = vmatprep.subr.mxu0 0.0
    %931 = vmatpush1.msra.mxu0 0.0
    %932 = vmatprep.subr.mxu0 0.0
    %933 = vmatpush1.msra.mxu0 0.0
    %934 = vmatprep.subr.mxu0 0.0
    %935 = vmatpush1.msra.mxu0 0.0
    %936 = vmatprep.mubr.f32.mxu0 0.0
    %937 = vmatmul.mubr.f32.gmra.mrb[0].mxu0 %v323
    %v938 = vpop.f32.mrb[0].mxu0
    %v939 = vadd.f32 0.0, %v938
    %v940 = vpop.f32.mrb[0].mxu0
    %941 = vmatprep.mubr.f32.mxu0 0.0
    %942 = vmatmul.mubr.f32.gmra.mrb[0].mxu0 %v326
    %v943 = vpop.f32.mrb[0].mxu0
    %v944 = vadd.f32 0.0, %v943
    %v945 = vpop.f32.mrb[0].mxu0
    %946 = vmatprep.mubr.f32.mxu0 0.0
    %947 = vmatmul.mubr.f32.gmra.mrb[0].mxu0 %v329
    %v948 = vpop.f32.mrb[0].mxu0
    %v949 = vadd.f32 0.0, %v948
    %v950 = vpop.f32.mrb[0].mxu0
    %951 = vmatprep.mubr.f32.mxu0 0.0
    %952 = vmatmul.mubr.f32.gmra.mrb[0].mxu0 %v332
    %v953 = vpop.f32.mrb[0].mxu0
    %v954 = vadd.f32 0.0, %v953
    %v955 = vpop.f32.mrb[0].mxu0
    %956 = vmatprep.mubr.f32.mxu0 0.0
    %957 = vmatmul.mubr.f32.gmra.mrb[0].mxu0 %v335
    %v958 = vpop.f32.mrb[0].mxu0
    %v959 = vadd.f32 0.0, %v958
    %v960 = vpop.f32.mrb[0].mxu0
    %961 = vmatprep.mubr.f32.mxu0 0.0
    %962 = vmatmul.mubr.f32.gmra.mrb[0].mxu0 %v338
    %v963 = vpop.f32.mrb[0].mxu0
    %v964 = vadd.f32 0.0, %v963
    %v965 = vpop.f32.mrb[0].mxu0
    %966 = vmatprep.mubr.f32.mxu0 0.0
    %967 = vmatmul.mubr.f32.gmra.mrb[0].mxu0 %v341
    %v968 = vpop.f32.mrb[0].mxu0
    %v969 = vadd.f32 0.0, %v968
    %v970 = vpop.f32.mrb[0].mxu0
    %971 = vmatprep.mubr.f32.mxu0 0.0
    %972 = vmatmul.mubr.f32.gmra.mrb[0].mxu0 %v344
    %v973 = vpop.f32.mrb[0].mxu0
    %v974 = vadd.f32 0.0, %v973
    %v975 = vpop.f32.mrb[0].mxu0
    %976 = vmatprep.mubr.f32.mxu0 0.0
    %977 = vmatmul.mubr.f32.gmra.mrb[0].mxu0 %v347
    %v978 = vpop.f32.mrb[0].mxu0
    %v979 = vadd.f32 0.0, %v978
    %v980 = vpop.f32.mrb[0].mxu0
    %981 = vmatprep.mubr.f32.mxu0 0.0
    %982 = vmatmul.mubr.f32.gmra.mrb[0].mxu0 %v350
    %v983 = vpop.f32.mrb[0].mxu0
    %v984 = vadd.f32 0.0, %v983
    %v985 = vpop.f32.mrb[0].mxu0
    %986 = vmatprep.mubr.f32.mxu0 0.0
    %987 = vmatmul.mubr.f32.gmra.mrb[0].mxu0 %v353
    %v988 = vpop.f32.mrb[0].mxu0
    %v989 = vadd.f32 0.0, %v988
    %v990 = vpop.f32.mrb[0].mxu0
    %991 = vmatprep.mubr.f32.mxu0 0.0
    %992 = vmatmul.mubr.f32.gmra.mrb[0].mxu0 %v356
    %v993 = vpop.f32.mrb[0].mxu0
    %v994 = vadd.f32 0.0, %v993
    %v995 = vpop.f32.mrb[0].mxu0
    %996 = vmatprep.mubr.f32.mxu0 0.0
    %997 = vmatmul.mubr.f32.gmra.mrb[0].mxu0 %v359
    %v998 = vpop.f32.mrb[0].mxu0
    %v999 = vadd.f32 0.0, %v998
    %v1000 = vpop.f32.mrb[0].mxu0
    %1001 = vmatprep.mubr.f32.mxu0 0.0
    %1002 = vmatmul.mubr.f32.gmra.mrb[0].mxu0 %v362
    %v1003 = vpop.f32.mrb[0].mxu0
    %v1004 = vadd.f32 0.0, %v1003
    %v1005 = vpop.f32.mrb[0].mxu0
    %1006 = vmatprep.mubr.f32.mxu0 0.0
    %1007 = vmatmul.mubr.f32.gmra.mrb[0].mxu0 %v365
    %v1008 = vpop.f32.mrb[0].mxu0
    %v1009 = vadd.f32 0.0, %v1008
    %v1010 = vpop.f32.mrb[0].mxu0
    %1011 = vmatprep.mubr.f32.mxu0 0.0
    %1012 = vmatmul.mubr.f32.gmra.mrb[0].mxu0 %v368
    %v1013 = vpop.f32.mrb[0].mxu0
    %v1014 = vadd.f32 0.0, %v1013
    %v1015 = vpop.f32.mrb[0].mxu0
    %1016 = vdwg.mxu0
    %1017 = vset.pattern.permute.xlu0 2
    %1018 = vperm.xlu0 %1017, %v296
    %v1019 = vpop.permute.xlu0 %1018
    %1021 = vset.pattern.permute.xlu0 2
    %1022 = vperm.xlu0 %1021, %v297
    %v1023 = vpop.permute.xlu0 %1022
    %1025 = vset.pattern.permute.xlu0 2
    %1026 = vperm.xlu0 %1025, %v298
    %v1027 = vpop.permute.xlu0 %1026
    %1029 = vset.pattern.permute.xlu0 2
    %1030 = vperm.xlu0 %1029, %v299
    %v1031 = vpop.permute.xlu0 %1030
    %1033 = vset.pattern.permute.xlu0 2
    %1034 = vperm.xlu0 %1033, %v300
    %v1035 = vpop.permute.xlu0 %1034
    %1037 = vset.pattern.permute.xlu0 2
    %1038 = vperm.xlu0 %1037, %v301
    %v1039 = vpop.permute.xlu0 %1038
    %1041 = vset.pattern.permute.xlu0 2
    %1042 = vperm.xlu0 %1041, %v302
    %v1043 = vpop.permute.xlu0 %1042
    %1045 = vset.pattern.permute.xlu0 2
    %1046 = vperm.xlu0 %1045, %v303
    %v1047 = vpop.permute.xlu0 %1046
    %1049 = vset.pattern.permute.xlu0 2
    %1050 = vperm.xlu0 %1049, %v304
    %v1051 = vpop.permute.xlu0 %1050
    %1053 = vset.pattern.permute.xlu0 2
    %1054 = vperm.xlu0 %1053, %v305
    %v1055 = vpop.permute.xlu0 %1054
    %1057 = vset.pattern.permute.xlu0 2
    %1058 = vperm.xlu0 %1057, %v306
    %v1059 = vpop.permute.xlu0 %1058
    %1061 = vset.pattern.permute.xlu0 2
    %1062 = vperm.xlu0 %1061, %v307
    %v1063 = vpop.permute.xlu0 %1062
    %1065 = vset.pattern.permute.xlu0 2
    %1066 = vperm.xlu0 %1065, %v308
    %v1067 = vpop.permute.xlu0 %1066
    %1069 = vset.pattern.permute.xlu0 2
    %1070 = vperm.xlu0 %1069, %v309
    %v1071 = vpop.permute.xlu0 %1070
    %1073 = vset.pattern.permute.xlu0 2
    %1074 = vperm.xlu0 %1073, %v310
    %v1075 = vpop.permute.xlu0 %1074
    %1077 = vset.pattern.permute.xlu0 2
    %1078 = vperm.xlu0 %1077, %v311
    %v1079 = vpop.permute.xlu0 %1078
    %v1081 = vmul.f32 %v1019, %v939
    %v1082 = vmul.f32 %v1023, %v944
    %v1083 = vmul.f32 %v1027, %v949
    %v1084 = vmul.f32 %v1031, %v954
    %v1085 = vmul.f32 %v1035, %v959
    %v1086 = vmul.f32 %v1039, %v964
    %v1087 = vmul.f32 %v1043, %v969
    %v1088 = vmul.f32 %v1047, %v974
    %v1089 = vmul.f32 %v1051, %v979
    %v1090 = vmul.f32 %v1055, %v984
    %v1091 = vmul.f32 %v1059, %v989
    %v1092 = vmul.f32 %v1063, %v994
    %v1093 = vmul.f32 %v1067, %v999
    %v1094 = vmul.f32 %v1071, %v1004
    %v1095 = vmul.f32 %v1075, %v1009
    %v1096 = vmul.f32 %v1079, %v1014
    %v1097 = vadd.f32 %v854, %v1081
    %v1098 = vadd.f32 %v855, %v1082
    %v1099 = vadd.f32 %v856, %v1083
    %v1100 = vadd.f32 %v857, %v1084
    %v1101 = vadd.f32 %v858, %v1085
    %v1102 = vadd.f32 %v859, %v1086
    %v1103 = vadd.f32 %v860, %v1087
    %v1104 = vadd.f32 %v861, %v1088
    %v1105 = vadd.f32 %v862, %v1089
    %v1106 = vadd.f32 %v863, %v1090
    %v1107 = vadd.f32 %v864, %v1091
    %v1108 = vadd.f32 %v865, %v1092
    %v1109 = vadd.f32 %v866, %v1093
    %v1110 = vadd.f32 %v867, %v1094
    %v1111 = vadd.f32 %v868, %v1095
    %v1112 = vadd.f32 %v869, %v1096
    %v1113 = vld [vmem:[%s3 + $0x30] sm:$0xff]
    %v1114 = vld [vmem:[%s3 + $0x38] sm:$0xff]
    %1115 = vmatprep.subr.mxu0 0.0
    %1116 = vmatpush1.msra.mxu0 %v1113
    %1117 = vmatprep.subr.mxu0 0.0
    %1118 = vmatpush1.msra.mxu0 %v1114
    %1119 = vmatprep.subr.mxu0 0.0
    %1120 = vmatpush1.msra.mxu0 0.0
    %1121 = vmatprep.subr.mxu0 0.0
    %1122 = vmatpush1.msra.mxu0 0.0
    %1123 = vmatprep.subr.mxu0 0.0
    %1124 = vmatpush1.msra.mxu0 0.0
    %1125 = vmatprep.subr.mxu0 0.0
    %1126 = vmatpush1.msra.mxu0 0.0
    %1127 = vmatprep.subr.mxu0 0.0
    %1128 = vmatpush1.msra.mxu0 0.0
    %1129 = vmatprep.subr.mxu0 0.0
    %1130 = vmatpush1.msra.mxu0 0.0
    %1131 = vmatprep.subr.mxu0 0.0
    %1132 = vmatpush1.msra.mxu0 0.0
    %1133 = vmatprep.subr.mxu0 0.0
    %1134 = vmatpush1.msra.mxu0 0.0
    %1135 = vmatprep.subr.mxu0 0.0
    %1136 = vmatpush1.msra.mxu0 0.0
    %1137 = vmatprep.subr.mxu0 0.0
    %1138 = vmatpush1.msra.mxu0 0.0
    %1139 = vmatprep.subr.mxu0 0.0
    %1140 = vmatpush1.msra.mxu0 0.0
    %1141 = vmatprep.subr.mxu0 0.0
    %1142 = vmatpush1.msra.mxu0 0.0
    %1143 = vmatprep.subr.mxu0 0.0
    %1144 = vmatpush1.msra.mxu0 0.0
    %1145 = vmatprep.subr.mxu0 0.0
    %1146 = vmatpush1.msra.mxu0 0.0
    %1147 = vmatprep.subr.mxu0 0.0
    %1148 = vmatpush1.msra.mxu0 0.0
    %1149 = vmatprep.subr.mxu0 0.0
    %1150 = vmatpush1.msra.mxu0 0.0
    %1151 = vmatprep.subr.mxu0 0.0
    %1152 = vmatpush1.msra.mxu0 0.0
    %1153 = vmatprep.subr.mxu0 0.0
    %1154 = vmatpush1.msra.mxu0 0.0
    %1155 = vmatprep.subr.mxu0 0.0
    %1156 = vmatpush1.msra.mxu0 0.0
    %1157 = vmatprep.subr.mxu0 0.0
    %1158 = vmatpush1.msra.mxu0 0.0
    %1159 = vmatprep.subr.mxu0 0.0
    %1160 = vmatpush1.msra.mxu0 0.0
    %1161 = vmatprep.subr.mxu0 0.0
    %1162 = vmatpush1.msra.mxu0 0.0
    %1163 = vmatprep.subr.mxu0 0.0
    %1164 = vmatpush1.msra.mxu0 0.0
    %1165 = vmatprep.subr.mxu0 0.0
    %1166 = vmatpush1.msra.mxu0 0.0
    %1167 = vmatprep.subr.mxu0 0.0
    %1168 = vmatpush1.msra.mxu0 0.0
    %1169 = vmatprep.subr.mxu0 0.0
    %1170 = vmatpush1.msra.mxu0 0.0
    %1171 = vmatprep.subr.mxu0 0.0
    %1172 = vmatpush1.msra.mxu0 0.0
    %1173 = vmatprep.subr.mxu0 0.0
    %1174 = vmatpush1.msra.mxu0 0.0
    %1175 = vmatprep.subr.mxu0 0.0
    %1176 = vmatpush1.msra.mxu0 0.0
    %1177 = vmatprep.subr.mxu0 0.0
    %1178 = vmatpush1.msra.mxu0 0.0
    %1179 = vmatprep.mubr.f32.mxu0 0.0
    %1180 = vmatmul.mubr.f32.gmra.mrb[0].mxu0 %v323
    %v1181 = vpop.f32.mrb[0].mxu0
    %v1182 = vadd.f32 0.0, %v1181
    %v1183 = vpop.f32.mrb[0].mxu0
    %1184 = vmatprep.mubr.f32.mxu0 0.0
    %1185 = vmatmul.mubr.f32.gmra.mrb[0].mxu0 %v326
    %v1186 = vpop.f32.mrb[0].mxu0
    %v1187 = vadd.f32 0.0, %v1186
    %v1188 = vpop.f32.mrb[0].mxu0
    %1189 = vmatprep.mubr.f32.mxu0 0.0
    %1190 = vmatmul.mubr.f32.gmra.mrb[0].mxu0 %v329
    %v1191 = vpop.f32.mrb[0].mxu0
    %v1192 = vadd.f32 0.0, %v1191
    %v1193 = vpop.f32.mrb[0].mxu0
    %1194 = vmatprep.mubr.f32.mxu0 0.0
    %1195 = vmatmul.mubr.f32.gmra.mrb[0].mxu0 %v332
    %v1196 = vpop.f32.mrb[0].mxu0
    %v1197 = vadd.f32 0.0, %v1196
    %v1198 = vpop.f32.mrb[0].mxu0
    %1199 = vmatprep.mubr.f32.mxu0 0.0
    %1200 = vmatmul.mubr.f32.gmra.mrb[0].mxu0 %v335
    %v1201 = vpop.f32.mrb[0].mxu0
    %v1202 = vadd.f32 0.0, %v1201
    %v1203 = vpop.f32.mrb[0].mxu0
    %1204 = vmatprep.mubr.f32.mxu0 0.0
    %1205 = vmatmul.mubr.f32.gmra.mrb[0].mxu0 %v338
    %v1206 = vpop.f32.mrb[0].mxu0
    %v1207 = vadd.f32 0.0, %v1206
    %v1208 = vpop.f32.mrb[0].mxu0
    %1209 = vmatprep.mubr.f32.mxu0 0.0
    %1210 = vmatmul.mubr.f32.gmra.mrb[0].mxu0 %v341
    %v1211 = vpop.f32.mrb[0].mxu0
    %v1212 = vadd.f32 0.0, %v1211
    %v1213 = vpop.f32.mrb[0].mxu0
    %1214 = vmatprep.mubr.f32.mxu0 0.0
    %1215 = vmatmul.mubr.f32.gmra.mrb[0].mxu0 %v344
    %v1216 = vpop.f32.mrb[0].mxu0
    %v1217 = vadd.f32 0.0, %v1216
    %v1218 = vpop.f32.mrb[0].mxu0
    %1219 = vmatprep.mubr.f32.mxu0 0.0
    %1220 = vmatmul.mubr.f32.gmra.mrb[0].mxu0 %v347
    %v1221 = vpop.f32.mrb[0].mxu0
    %v1222 = vadd.f32 0.0, %v1221
    %v1223 = vpop.f32.mrb[0].mxu0
    %1224 = vmatprep.mubr.f32.mxu0 0.0
    %1225 = vmatmul.mubr.f32.gmra.mrb[0].mxu0 %v350
    %v1226 = vpop.f32.mrb[0].mxu0
    %v1227 = vadd.f32 0.0, %v1226
    %v1228 = vpop.f32.mrb[0].mxu0
    %1229 = vmatprep.mubr.f32.mxu0 0.0
    %1230 = vmatmul.mubr.f32.gmra.mrb[0].mxu0 %v353
    %v1231 = vpop.f32.mrb[0].mxu0
    %v1232 = vadd.f32 0.0, %v1231
    %v1233 = vpop.f32.mrb[0].mxu0
    %1234 = vmatprep.mubr.f32.mxu0 0.0
    %1235 = vmatmul.mubr.f32.gmra.mrb[0].mxu0 %v356
    %v1236 = vpop.f32.mrb[0].mxu0
    %v1237 = vadd.f32 0.0, %v1236
    %v1238 = vpop.f32.mrb[0].mxu0
    %1239 = vmatprep.mubr.f32.mxu0 0.0
    %1240 = vmatmul.mubr.f32.gmra.mrb[0].mxu0 %v359
    %v1241 = vpop.f32.mrb[0].mxu0
    %v1242 = vadd.f32 0.0, %v1241
    %v1243 = vpop.f32.mrb[0].mxu0
    %1244 = vmatprep.mubr.f32.mxu0 0.0
    %1245 = vmatmul.mubr.f32.gmra.mrb[0].mxu0 %v362
    %v1246 = vpop.f32.mrb[0].mxu0
    %v1247 = vadd.f32 0.0, %v1246
    %v1248 = vpop.f32.mrb[0].mxu0
    %1249 = vmatprep.mubr.f32.mxu0 0.0
    %1250 = vmatmul.mubr.f32.gmra.mrb[0].mxu0 %v365
    %v1251 = vpop.f32.mrb[0].mxu0
    %v1252 = vadd.f32 0.0, %v1251
    %v1253 = vpop.f32.mrb[0].mxu0
    %1254 = vmatprep.mubr.f32.mxu0 0.0
    %1255 = vmatmul.mubr.f32.gmra.mrb[0].mxu0 %v368
    %v1256 = vpop.f32.mrb[0].mxu0
    %v1257 = vadd.f32 0.0, %v1256
    %v1258 = vpop.f32.mrb[0].mxu0
    %1259 = vdwg.mxu0
    %1260 = vset.pattern.permute.xlu0 3
    %1261 = vperm.xlu0 %1260, %v296
    %v1262 = vpop.permute.xlu0 %1261
    %1264 = vset.pattern.permute.xlu0 3
    %1265 = vperm.xlu0 %1264, %v297
    %v1266 = vpop.permute.xlu0 %1265
    %1268 = vset.pattern.permute.xlu0 3
    %1269 = vperm.xlu0 %1268, %v298
    %v1270 = vpop.permute.xlu0 %1269
    %1272 = vset.pattern.permute.xlu0 3
    %1273 = vperm.xlu0 %1272, %v299
    %v1274 = vpop.permute.xlu0 %1273
    %1276 = vset.pattern.permute.xlu0 3
    %1277 = vperm.xlu0 %1276, %v300
    %v1278 = vpop.permute.xlu0 %1277
    %1280 = vset.pattern.permute.xlu0 3
    %1281 = vperm.xlu0 %1280, %v301
    %v1282 = vpop.permute.xlu0 %1281
    %1284 = vset.pattern.permute.xlu0 3
    %1285 = vperm.xlu0 %1284, %v302
    %v1286 = vpop.permute.xlu0 %1285
    %1288 = vset.pattern.permute.xlu0 3
    %1289 = vperm.xlu0 %1288, %v303
    %v1290 = vpop.permute.xlu0 %1289
    %1292 = vset.pattern.permute.xlu0 3
    %1293 = vperm.xlu0 %1292, %v304
    %v1294 = vpop.permute.xlu0 %1293
    %1296 = vset.pattern.permute.xlu0 3
    %1297 = vperm.xlu0 %1296, %v305
    %v1298 = vpop.permute.xlu0 %1297
    %1300 = vset.pattern.permute.xlu0 3
    %1301 = vperm.xlu0 %1300, %v306
    %v1302 = vpop.permute.xlu0 %1301
    %1304 = vset.pattern.permute.xlu0 3
    %1305 = vperm.xlu0 %1304, %v307
    %v1306 = vpop.permute.xlu0 %1305
    %1308 = vset.pattern.permute.xlu0 3
    %1309 = vperm.xlu0 %1308, %v308
    %v1310 = vpop.permute.xlu0 %1309
    %1312 = vset.pattern.permute.xlu0 3
    %1313 = vperm.xlu0 %1312, %v309
    %v1314 = vpop.permute.xlu0 %1313
    %1316 = vset.pattern.permute.xlu0 3
    %1317 = vperm.xlu0 %1316, %v310
    %v1318 = vpop.permute.xlu0 %1317
    %1320 = vset.pattern.permute.xlu0 3
    %1321 = vperm.xlu0 %1320, %v311
    %v1322 = vpop.permute.xlu0 %1321
    %v1324 = vmul.f32 %v1262, %v1182
    %v1325 = vmul.f32 %v1266, %v1187
    %v1326 = vmul.f32 %v1270, %v1192
    %v1327 = vmul.f32 %v1274, %v1197
    %v1328 = vmul.f32 %v1278, %v1202
    %v1329 = vmul.f32 %v1282, %v1207
    %v1330 = vmul.f32 %v1286, %v1212
    %v1331 = vmul.f32 %v1290, %v1217
    %v1332 = vmul.f32 %v1294, %v1222
    %v1333 = vmul.f32 %v1298, %v1227
    %v1334 = vmul.f32 %v1302, %v1232
    %v1335 = vmul.f32 %v1306, %v1237
    %v1336 = vmul.f32 %v1310, %v1242
    %v1337 = vmul.f32 %v1314, %v1247
    %v1338 = vmul.f32 %v1318, %v1252
    %v1339 = vmul.f32 %v1322, %v1257
    %v1340 = vadd.f32 %v1097, %v1324
    %v1341 = vadd.f32 %v1098, %v1325
    %v1342 = vadd.f32 %v1099, %v1326
    %v1343 = vadd.f32 %v1100, %v1327
    %v1344 = vadd.f32 %v1101, %v1328
    %v1345 = vadd.f32 %v1102, %v1329
    %v1346 = vadd.f32 %v1103, %v1330
    %v1347 = vadd.f32 %v1104, %v1331
    %v1348 = vadd.f32 %v1105, %v1332
    %v1349 = vadd.f32 %v1106, %v1333
    %v1350 = vadd.f32 %v1107, %v1334
    %v1351 = vadd.f32 %v1108, %v1335
    %v1352 = vadd.f32 %v1109, %v1336
    %v1353 = vadd.f32 %v1110, %v1337
    %v1354 = vadd.f32 %v1111, %v1338
    %v1355 = vadd.f32 %v1112, %v1339
    %v1356 = vmax.f32 %v1340, 0.0
    %v1357 = vmax.f32 %v1341, 0.0
    %v1358 = vmax.f32 %v1342, 0.0
    %v1359 = vmax.f32 %v1343, 0.0
    %v1360 = vmax.f32 %v1344, 0.0
    %v1361 = vmax.f32 %v1345, 0.0
    %v1362 = vmax.f32 %v1346, 0.0
    %v1363 = vmax.f32 %v1347, 0.0
    %v1364 = vmax.f32 %v1348, 0.0
    %v1365 = vmax.f32 %v1349, 0.0
    %v1366 = vmax.f32 %v1350, 0.0
    %v1367 = vmax.f32 %v1351, 0.0
    %v1368 = vmax.f32 %v1352, 0.0
    %v1369 = vmax.f32 %v1353, 0.0
    %v1370 = vmax.f32 %v1354, 0.0
    %v1371 = vmax.f32 %v1355, 0.0
    %v1372 = vadd.f32 %v1356, %v1360
    %v1373 = vadd.f32 %v1357, %v1361
    %v1374 = vadd.f32 %v1358, %v1362
    %v1375 = vadd.f32 %v1359, %v1363
    %v1376 = vadd.f32 %v1372, %v1364
    %v1377 = vadd.f32 %v1373, %v1365
    %v1378 = vadd.f32 %v1374, %v1366
    %v1379 = vadd.f32 %v1375, %v1367
    %v1380 = vadd.f32 %v1376, %v1368
    %v1381 = vadd.f32 %v1377, %v1369
    %v1382 = vadd.f32 %v1378, %v1370
    %v1383 = vadd.f32 %v1379, %v1371
    %v1384 = vmul.f32 %v1380, 0.25
    %v1385 = vmul.f32 %v1381, 0.25
    %v1386 = vmul.f32 %v1382, 0.25
    %v1387 = vmul.f32 %v1383, 0.25
    %s1388 = scalar_lea.vmem %s1, 128
    %v1389 = vld [vmem:[%s1388] sm:$0xff]
    %v1390 = vld [vmem:[%s1388 + $0x8] sm:$0xff]
    %v1391 = vld [vmem:[%s1388 + $0x10] sm:$0xff]
    %v1392 = vld [vmem:[%s1388 + $0x18] sm:$0xff]
    %1393 = vset.pattern.permute.xlu0 0
    %1394 = vperm.xlu0 %1393, %v1389
    %v1395 = vpop.permute.xlu0 %1394
    %1396 = vset.pattern.permute.xlu0 0
    %1397 = vperm.xlu0 %1396, %v1390
    %v1398 = vpop.permute.xlu0 %1397
    %1399 = vset.pattern.permute.xlu0 0
    %1400 = vperm.xlu0 %1399, %v1391
    %v1401 = vpop.permute.xlu0 %1400
    %1402 = vset.pattern.permute.xlu0 0
    %1403 = vperm.xlu0 %1402, %v1392
    %v1404 = vpop.permute.xlu0 %1403
    %vm1405 = vcmp.eq.s32.totalorder %v1395, %v54
    %vm1406 = vcmp.eq.s32.totalorder %v1398, %v54
    %vm1407 = vcmp.eq.s32.totalorder %v1401, %v54
    %vm1408 = vcmp.eq.s32.totalorder %v1404, %v54
    %v1409 = vsel %vm1405, 1, 0
    %v1410 = vsel %vm1406, 1, 0
    %v1411 = vsel %vm1407, 1, 0
    %v1412 = vsel %vm1408, 1, 0
    %v1413 = vcvt.s32.f32 %v1409
    %v1414 = vcvt.s32.f32 %v1410
    %v1415 = vcvt.s32.f32 %v1411
    %v1416 = vcvt.s32.f32 %v1412
    %vm1417 = vcmask 261120
    %v1419 = vsel %vm1417, %v1413, 0
    %v1422 = vsel %vm1417, %v1414, 0
    %v1425 = vsel %vm1417, %v1415, 0
    %v1428 = vsel %vm1417, %v1416, 0
    %1430 = vmatprep.subr.mxu0 0.0
    %1431 = vmatpush1.msra.mxu0 %v1384
    %1432 = vmatprep.subr.mxu0 0.0
    %1433 = vmatpush1.msra.mxu0 %v1385
    %1434 = vmatprep.subr.mxu0 0.0
    %1435 = vmatpush1.msra.mxu0 %v1386
    %1436 = vmatprep.subr.mxu0 0.0
    %1437 = vmatpush1.msra.mxu0 %v1387
    %1438 = vmatprep.subr.mxu0 0.0
    %1439 = vmatpush1.msra.mxu0 0.0
    %1440 = vmatprep.subr.mxu0 0.0
    %1441 = vmatpush1.msra.mxu0 0.0
    %1442 = vmatprep.subr.mxu0 0.0
    %1443 = vmatpush1.msra.mxu0 0.0
    %1444 = vmatprep.subr.mxu0 0.0
    %1445 = vmatpush1.msra.mxu0 0.0
    %1446 = vmatprep.subr.mxu0 0.0
    %1447 = vmatpush1.msra.mxu0 0.0
    %1448 = vmatprep.subr.mxu0 0.0
    %1449 = vmatpush1.msra.mxu0 0.0
    %1450 = vmatprep.subr.mxu0 0.0
    %1451 = vmatpush1.msra.mxu0 0.0
    %1452 = vmatprep.subr.mxu0 0.0
    %1453 = vmatpush1.msra.mxu0 0.0
    %1454 = vmatprep.subr.mxu0 0.0
    %1455 = vmatpush1.msra.mxu0 0.0
    %1456 = vmatprep.subr.mxu0 0.0
    %1457 = vmatpush1.msra.mxu0 0.0
    %1458 = vmatprep.subr.mxu0 0.0
    %1459 = vmatpush1.msra.mxu0 0.0
    %1460 = vmatprep.subr.mxu0 0.0
    %1461 = vmatpush1.msra.mxu0 0.0
    %1462 = vmatprep.subr.mxu0 0.0
    %1463 = vmatpush1.msra.mxu0 0.0
    %1464 = vmatprep.subr.mxu0 0.0
    %1465 = vmatpush1.msra.mxu0 0.0
    %1466 = vmatprep.subr.mxu0 0.0
    %1467 = vmatpush1.msra.mxu0 0.0
    %1468 = vmatprep.subr.mxu0 0.0
    %1469 = vmatpush1.msra.mxu0 0.0
    %1470 = vmatprep.subr.mxu0 0.0
    %1471 = vmatpush1.msra.mxu0 0.0
    %1472 = vmatprep.subr.mxu0 0.0
    %1473 = vmatpush1.msra.mxu0 0.0
    %1474 = vmatprep.subr.mxu0 0.0
    %1475 = vmatpush1.msra.mxu0 0.0
    %1476 = vmatprep.subr.mxu0 0.0
    %1477 = vmatpush1.msra.mxu0 0.0
    %1478 = vmatprep.subr.mxu0 0.0
    %1479 = vmatpush1.msra.mxu0 0.0
    %1480 = vmatprep.subr.mxu0 0.0
    %1481 = vmatpush1.msra.mxu0 0.0
    %1482 = vmatprep.subr.mxu0 0.0
    %1483 = vmatpush1.msra.mxu0 0.0
    %1484 = vmatprep.subr.mxu0 0.0
    %1485 = vmatpush1.msra.mxu0 0.0
    %1486 = vmatprep.subr.mxu0 0.0
    %1487 = vmatpush1.msra.mxu0 0.0
    %1488 = vmatprep.subr.mxu0 0.0
    %1489 = vmatpush1.msra.mxu0 0.0
    %1490 = vmatprep.subr.mxu0 0.0
    %1491 = vmatpush1.msra.mxu0 0.0
    %1492 = vmatprep.subr.mxu0 0.0
    %1493 = vmatpush1.msra.mxu0 0.0
    %1494 = vmatprep.mubr.f32.mxu0 0.0
    %1495 = vmatmul.mubr.f32.gmra.mrb[0].mxu0 %v1419
    %v1496 = vpop.f32.mrb[0].mxu0
    %v1497 = vadd.f32 0.0, %v1496
    %v1498 = vpop.f32.mrb[0].mxu0
    %1499 = vmatprep.mubr.f32.mxu0 0.0
    %1500 = vmatmul.mubr.f32.gmra.mrb[0].mxu0 %v1422
    %v1501 = vpop.f32.mrb[0].mxu0
    %v1502 = vadd.f32 0.0, %v1501
    %v1503 = vpop.f32.mrb[0].mxu0
    %1504 = vmatprep.mubr.f32.mxu0 0.0
    %1505 = vmatmul.mubr.f32.gmra.mrb[0].mxu0 %v1425
    %v1506 = vpop.f32.mrb[0].mxu0
    %v1507 = vadd.f32 0.0, %v1506
    %v1508 = vpop.f32.mrb[0].mxu0
    %1509 = vmatprep.mubr.f32.mxu0 0.0
    %1510 = vmatmul.mubr.f32.gmra.mrb[0].mxu0 %v1428
    %v1511 = vpop.f32.mrb[0].mxu0
    %v1512 = vadd.f32 0.0, %v1511
    %v1513 = vpop.f32.mrb[0].mxu0
    %1514 = vdwg.mxu0
    %s1515 = scalar_lea.vmem %s2, 128
    %v1516 = vld [vmem:[%s1515] sm:$0xff]
    %v1517 = vld [vmem:[%s1515 + $0x8] sm:$0xff]
    %v1518 = vld [vmem:[%s1515 + $0x10] sm:$0xff]
    %v1519 = vld [vmem:[%s1515 + $0x18] sm:$0xff]
    %s1520 = scalar_lea.vmem %s4, 1
    %v1521 = vld [vmem:[%s1520] sm:$0x1]
    %v1523 = vlaneseq
    %v1524 = vshrl.u32 %v1523, 7
    %v1525 = vsub.s32 0, %v1524
    %v1526 = vrot.slane %v1521, %v1525
    %s1528 = scalar_lea.vmem %s3, 128
    %v1529 = vld [vmem:[%s1528] sm:$0xff]
    %v1530 = vld [vmem:[%s1528 + $0x8] sm:$0xff]
    %v1531 = vld [vmem:[%s1528 + $0x10] sm:$0xff]
    %v1532 = vld [vmem:[%s1528 + $0x18] sm:$0xff]
    %v1534 = vsel %vm1417, %v1497, 0
    %v1537 = vsel %vm1417, %v1502, 0
    %v1540 = vsel %vm1417, %v1507, 0
    %v1543 = vsel %vm1417, %v1512, 0
    %1545 = vmatprep.subr.mxu0 0.0
    %1546 = vmatpush1.msra.mxu0 %v1529
    %1547 = vmatprep.subr.mxu0 0.0
    %1548 = vmatpush1.msra.mxu0 %v1530
    %1549 = vmatprep.subr.mxu0 0.0
    %1550 = vmatpush1.msra.mxu0 %v1531
    %1551 = vmatprep.subr.mxu0 0.0
    %1552 = vmatpush1.msra.mxu0 %v1532
    %1553 = vmatprep.subr.mxu0 0.0
    %1554 = vmatpush1.msra.mxu0 0.0
    %1555 = vmatprep.subr.mxu0 0.0
    %1556 = vmatpush1.msra.mxu0 0.0
    %1557 = vmatprep.subr.mxu0 0.0
    %1558 = vmatpush1.msra.mxu0 0.0
    %1559 = vmatprep.subr.mxu0 0.0
    %1560 = vmatpush1.msra.mxu0 0.0
    %1561 = vmatprep.subr.mxu0 0.0
    %1562 = vmatpush1.msra.mxu0 0.0
    %1563 = vmatprep.subr.mxu0 0.0
    %1564 = vmatpush1.msra.mxu0 0.0
    %1565 = vmatprep.subr.mxu0 0.0
    %1566 = vmatpush1.msra.mxu0 0.0
    %1567 = vmatprep.subr.mxu0 0.0
    %1568 = vmatpush1.msra.mxu0 0.0
    %1569 = vmatprep.subr.mxu0 0.0
    %1570 = vmatpush1.msra.mxu0 0.0
    %1571 = vmatprep.subr.mxu0 0.0
    %1572 = vmatpush1.msra.mxu0 0.0
    %1573 = vmatprep.subr.mxu0 0.0
    %1574 = vmatpush1.msra.mxu0 0.0
    %1575 = vmatprep.subr.mxu0 0.0
    %1576 = vmatpush1.msra.mxu0 0.0
    %1577 = vmatprep.subr.mxu0 0.0
    %1578 = vmatpush1.msra.mxu0 0.0
    %1579 = vmatprep.subr.mxu0 0.0
    %1580 = vmatpush1.msra.mxu0 0.0
    %1581 = vmatprep.subr.mxu0 0.0
    %1582 = vmatpush1.msra.mxu0 0.0
    %1583 = vmatprep.subr.mxu0 0.0
    %1584 = vmatpush1.msra.mxu0 0.0
    %1585 = vmatprep.subr.mxu0 0.0
    %1586 = vmatpush1.msra.mxu0 0.0
    %1587 = vmatprep.subr.mxu0 0.0
    %1588 = vmatpush1.msra.mxu0 0.0
    %1589 = vmatprep.subr.mxu0 0.0
    %1590 = vmatpush1.msra.mxu0 0.0
    %1591 = vmatprep.subr.mxu0 0.0
    %1592 = vmatpush1.msra.mxu0 0.0
    %1593 = vmatprep.subr.mxu0 0.0
    %1594 = vmatpush1.msra.mxu0 0.0
    %1595 = vmatprep.subr.mxu0 0.0
    %1596 = vmatpush1.msra.mxu0 0.0
    %1597 = vmatprep.subr.mxu0 0.0
    %1598 = vmatpush1.msra.mxu0 0.0
    %1599 = vmatprep.subr.mxu0 0.0
    %1600 = vmatpush1.msra.mxu0 0.0
    %1601 = vmatprep.subr.mxu0 0.0
    %1602 = vmatpush1.msra.mxu0 0.0
    %1603 = vmatprep.subr.mxu0 0.0
    %1604 = vmatpush1.msra.mxu0 0.0
    %1605 = vmatprep.subr.mxu0 0.0
    %1606 = vmatpush1.msra.mxu0 0.0
    %1607 = vmatprep.subr.mxu0 0.0
    %1608 = vmatpush1.msra.mxu0 0.0
    %1609 = vmatprep.mubr.f32.mxu0 0.0
    %1610 = vmatmul.mubr.f32.gmra.mrb[0].mxu0 %v1534
    %v1611 = vpop.f32.mrb[0].mxu0
    %v1612 = vadd.f32 0.0, %v1611
    %v1613 = vpop.f32.mrb[0].mxu0
    %1614 = vmatprep.mubr.f32.mxu0 0.0
    %1615 = vmatmul.mubr.f32.gmra.mrb[0].mxu0 %v1537
    %v1616 = vpop.f32.mrb[0].mxu0
    %v1617 = vadd.f32 0.0, %v1616
    %v1618 = vpop.f32.mrb[0].mxu0
    %1619 = vmatprep.mubr.f32.mxu0 0.0
    %1620 = vmatmul.mubr.f32.gmra.mrb[0].mxu0 %v1540
    %v1621 = vpop.f32.mrb[0].mxu0
    %v1622 = vadd.f32 0.0, %v1621
    %v1623 = vpop.f32.mrb[0].mxu0
    %1624 = vmatprep.mubr.f32.mxu0 0.0
    %1625 = vmatmul.mubr.f32.gmra.mrb[0].mxu0 %v1543
    %v1626 = vpop.f32.mrb[0].mxu0
    %v1627 = vadd.f32 0.0, %v1626
    %v1628 = vpop.f32.mrb[0].mxu0
    %1629 = vdwg.mxu0
    %1631 = vset.pattern.permute.xlu0 0
    %1632 = vperm.xlu0 %1631, %v1516
    %v1633 = vpop.permute.xlu0 %1632
    %1636 = vset.pattern.permute.xlu0 0
    %1637 = vperm.xlu0 %1636, %v1517
    %v1638 = vpop.permute.xlu0 %1637
    %1641 = vset.pattern.permute.xlu0 0
    %1642 = vperm.xlu0 %1641, %v1518
    %v1643 = vpop.permute.xlu0 %1642
    %1646 = vset.pattern.permute.xlu0 0
    %1647 = vperm.xlu0 %1646, %v1519
    %v1648 = vpop.permute.xlu0 %1647
    %v1650 = vmul.f32 %v1633, %v1612
    %v1651 = vmul.f32 %v1638, %v1617
    %v1652 = vmul.f32 %v1643, %v1622
    %v1653 = vmul.f32 %v1648, %v1627
    %v1654 = vadd.f32 %v1526, %v1650
    %v1655 = vadd.f32 %v1526, %v1651
    %v1656 = vadd.f32 %v1526, %v1652
    %v1657 = vadd.f32 %v1526, %v1653
    %v1658 = vld [vmem:[%s1528 + $0x20] sm:$0xff]
    %v1659 = vld [vmem:[%s1528 + $0x28] sm:$0xff]
    %v1660 = vld [vmem:[%s1528 + $0x30] sm:$0xff]
    %v1661 = vld [vmem:[%s1528 + $0x38] sm:$0xff]
    %1662 = vmatprep.subr.mxu0 0.0
    %1663 = vmatpush1.msra.mxu0 %v1658
    %1664 = vmatprep.subr.mxu0 0.0
    %1665 = vmatpush1.msra.mxu0 %v1659
    %1666 = vmatprep.subr.mxu0 0.0
    %1667 = vmatpush1.msra.mxu0 %v1660
    %1668 = vmatprep.subr.mxu0 0.0
    %1669 = vmatpush1.msra.mxu0 %v1661
    %1670 = vmatprep.subr.mxu0 0.0
    %1671 = vmatpush1.msra.mxu0 0.0
    %1672 = vmatprep.subr.mxu0 0.0
    %1673 = vmatpush1.msra.mxu0 0.0
    %1674 = vmatprep.subr.mxu0 0.0
    %1675 = vmatpush1.msra.mxu0 0.0
    %1676 = vmatprep.subr.mxu0 0.0
    %1677 = vmatpush1.msra.mxu0 0.0
    %1678 = vmatprep.subr.mxu0 0.0
    %1679 = vmatpush1.msra.mxu0 0.0
    %1680 = vmatprep.subr.mxu0 0.0
    %1681 = vmatpush1.msra.mxu0 0.0
    %1682 = vmatprep.subr.mxu0 0.0
    %1683 = vmatpush1.msra.mxu0 0.0
    %1684 = vmatprep.subr.mxu0 0.0
    %1685 = vmatpush1.msra.mxu0 0.0
    %1686 = vmatprep.subr.mxu0 0.0
    %1687 = vmatpush1.msra.mxu0 0.0
    %1688 = vmatprep.subr.mxu0 0.0
    %1689 = vmatpush1.msra.mxu0 0.0
    %1690 = vmatprep.subr.mxu0 0.0
    %1691 = vmatpush1.msra.mxu0 0.0
    %1692 = vmatprep.subr.mxu0 0.0
    %1693 = vmatpush1.msra.mxu0 0.0
    %1694 = vmatprep.subr.mxu0 0.0
    %1695 = vmatpush1.msra.mxu0 0.0
    %1696 = vmatprep.subr.mxu0 0.0
    %1697 = vmatpush1.msra.mxu0 0.0
    %1698 = vmatprep.subr.mxu0 0.0
    %1699 = vmatpush1.msra.mxu0 0.0
    %1700 = vmatprep.subr.mxu0 0.0
    %1701 = vmatpush1.msra.mxu0 0.0
    %1702 = vmatprep.subr.mxu0 0.0
    %1703 = vmatpush1.msra.mxu0 0.0
    %1704 = vmatprep.subr.mxu0 0.0
    %1705 = vmatpush1.msra.mxu0 0.0
    %1706 = vmatprep.subr.mxu0 0.0
    %1707 = vmatpush1.msra.mxu0 0.0
    %1708 = vmatprep.subr.mxu0 0.0
    %1709 = vmatpush1.msra.mxu0 0.0
    %1710 = vmatprep.subr.mxu0 0.0
    %1711 = vmatpush1.msra.mxu0 0.0
    %1712 = vmatprep.subr.mxu0 0.0
    %1713 = vmatpush1.msra.mxu0 0.0
    %1714 = vmatprep.subr.mxu0 0.0
    %1715 = vmatpush1.msra.mxu0 0.0
    %1716 = vmatprep.subr.mxu0 0.0
    %1717 = vmatpush1.msra.mxu0 0.0
    %1718 = vmatprep.subr.mxu0 0.0
    %1719 = vmatpush1.msra.mxu0 0.0
    %1720 = vmatprep.subr.mxu0 0.0
    %1721 = vmatpush1.msra.mxu0 0.0
    %1722 = vmatprep.subr.mxu0 0.0
    %1723 = vmatpush1.msra.mxu0 0.0
    %1724 = vmatprep.subr.mxu0 0.0
    %1725 = vmatpush1.msra.mxu0 0.0
    %1726 = vmatprep.mubr.f32.mxu0 0.0
    %1727 = vmatmul.mubr.f32.gmra.mrb[0].mxu0 %v1534
    %v1728 = vpop.f32.mrb[0].mxu0
    %v1729 = vadd.f32 0.0, %v1728
    %v1730 = vpop.f32.mrb[0].mxu0
    %1731 = vmatprep.mubr.f32.mxu0 0.0
    %1732 = vmatmul.mubr.f32.gmra.mrb[0].mxu0 %v1537
    %v1733 = vpop.f32.mrb[0].mxu0
    %v1734 = vadd.f32 0.0, %v1733
    %v1735 = vpop.f32.mrb[0].mxu0
    %1736 = vmatprep.mubr.f32.mxu0 0.0
    %1737 = vmatmul.mubr.f32.gmra.mrb[0].mxu0 %v1540
    %v1738 = vpop.f32.mrb[0].mxu0
    %v1739 = vadd.f32 0.0, %v1738
    %v1740 = vpop.f32.mrb[0].mxu0
    %1741 = vmatprep.mubr.f32.mxu0 0.0
    %1742 = vmatmul.mubr.f32.gmra.mrb[0].mxu0 %v1543
    %v1743 = vpop.f32.mrb[0].mxu0
    %v1744 = vadd.f32 0.0, %v1743
    %v1745 = vpop.f32.mrb[0].mxu0
    %1746 = vdwg.mxu0
    %1747 = vset.pattern.permute.xlu0 1
    %1748 = vperm.xlu0 %1747, %v1516
    %v1749 = vpop.permute.xlu0 %1748
    %1751 = vset.pattern.permute.xlu0 1
    %1752 = vperm.xlu0 %1751, %v1517
    %v1753 = vpop.permute.xlu0 %1752
    %1755 = vset.pattern.permute.xlu0 1
    %1756 = vperm.xlu0 %1755, %v1518
    %v1757 = vpop.permute.xlu0 %1756
    %1759 = vset.pattern.permute.xlu0 1
    %1760 = vperm.xlu0 %1759, %v1519
    %v1761 = vpop.permute.xlu0 %1760
    %v1763 = vmul.f32 %v1749, %v1729
    %v1764 = vmul.f32 %v1753, %v1734
    %v1765 = vmul.f32 %v1757, %v1739
    %v1766 = vmul.f32 %v1761, %v1744
    %v1767 = vadd.f32 %v1654, %v1763
    %v1768 = vadd.f32 %v1655, %v1764
    %v1769 = vadd.f32 %v1656, %v1765
    %v1770 = vadd.f32 %v1657, %v1766
    %v1771 = vld [vmem:[%s1528 + $0x40] sm:$0xff]
    %v1772 = vld [vmem:[%s1528 + $0x48] sm:$0xff]
    %v1773 = vld [vmem:[%s1528 + $0x50] sm:$0xff]
    %v1774 = vld [vmem:[%s1528 + $0x58] sm:$0xff]
    %1775 = vmatprep.subr.mxu0 0.0
    %1776 = vmatpush1.msra.mxu0 %v1771
    %1777 = vmatprep.subr.mxu0 0.0
    %1778 = vmatpush1.msra.mxu0 %v1772
    %1779 = vmatprep.subr.mxu0 0.0
    %1780 = vmatpush1.msra.mxu0 %v1773
    %1781 = vmatprep.subr.mxu0 0.0
    %1782 = vmatpush1.msra.mxu0 %v1774
    %1783 = vmatprep.subr.mxu0 0.0
    %1784 = vmatpush1.msra.mxu0 0.0
    %1785 = vmatprep.subr.mxu0 0.0
    %1786 = vmatpush1.msra.mxu0 0.0
    %1787 = vmatprep.subr.mxu0 0.0
    %1788 = vmatpush1.msra.mxu0 0.0
    %1789 = vmatprep.subr.mxu0 0.0
    %1790 = vmatpush1.msra.mxu0 0.0
    %1791 = vmatprep.subr.mxu0 0.0
    %1792 = vmatpush1.msra.mxu0 0.0
    %1793 = vmatprep.subr.mxu0 0.0
    %1794 = vmatpush1.msra.mxu0 0.0
    %1795 = vmatprep.subr.mxu0 0.0
    %1796 = vmatpush1.msra.mxu0 0.0
    %1797 = vmatprep.subr.mxu0 0.0
    %1798 = vmatpush1.msra.mxu0 0.0
    %1799 = vmatprep.subr.mxu0 0.0
    %1800 = vmatpush1.msra.mxu0 0.0
    %1801 = vmatprep.subr.mxu0 0.0
    %1802 = vmatpush1.msra.mxu0 0.0
    %1803 = vmatprep.subr.mxu0 0.0
    %1804 = vmatpush1.msra.mxu0 0.0
    %1805 = vmatprep.subr.mxu0 0.0
    %1806 = vmatpush1.msra.mxu0 0.0
    %1807 = vmatprep.subr.mxu0 0.0
    %1808 = vmatpush1.msra.mxu0 0.0
    %1809 = vmatprep.subr.mxu0 0.0
    %1810 = vmatpush1.msra.mxu0 0.0
    %1811 = vmatprep.subr.mxu0 0.0
    %1812 = vmatpush1.msra.mxu0 0.0
    %1813 = vmatprep.subr.mxu0 0.0
    %1814 = vmatpush1.msra.mxu0 0.0
    %1815 = vmatprep.subr.mxu0 0.0
    %1816 = vmatpush1.msra.mxu0 0.0
    %1817 = vmatprep.subr.mxu0 0.0
    %1818 = vmatpush1.msra.mxu0 0.0
    %1819 = vmatprep.subr.mxu0 0.0
    %1820 = vmatpush1.msra.mxu0 0.0
    %1821 = vmatprep.subr.mxu0 0.0
    %1822 = vmatpush1.msra.mxu0 0.0
    %1823 = vmatprep.subr.mxu0 0.0
    %1824 = vmatpush1.msra.mxu0 0.0
    %1825 = vmatprep.subr.mxu0 0.0
    %1826 = vmatpush1.msra.mxu0 0.0
    %1827 = vmatprep.subr.mxu0 0.0
    %1828 = vmatpush1.msra.mxu0 0.0
    %1829 = vmatprep.subr.mxu0 0.0
    %1830 = vmatpush1.msra.mxu0 0.0
    %1831 = vmatprep.subr.mxu0 0.0
    %1832 = vmatpush1.msra.mxu0 0.0
    %1833 = vmatprep.subr.mxu0 0.0
    %1834 = vmatpush1.msra.mxu0 0.0
    %1835 = vmatprep.subr.mxu0 0.0
    %1836 = vmatpush1.msra.mxu0 0.0
    %1837 = vmatprep.subr.mxu0 0.0
    %1838 = vmatpush1.msra.mxu0 0.0
    %1839 = vmatprep.mubr.f32.mxu0 0.0
    %1840 = vmatmul.mubr.f32.gmra.mrb[0].mxu0 %v1534
    %v1841 = vpop.f32.mrb[0].mxu0
    %v1842 = vadd.f32 0.0, %v1841
    %v1843 = vpop.f32.mrb[0].mxu0
    %1844 = vmatprep.mubr.f32.mxu0 0.0
    %1845 = vmatmul.mubr.f32.gmra.mrb[0].mxu0 %v1537
    %v1846 = vpop.f32.mrb[0].mxu0
    %v1847 = vadd.f32 0.0, %v1846
    %v1848 = vpop.f32.mrb[0].mxu0
    %1849 = vmatprep.mubr.f32.mxu0 0.0
    %1850 = vmatmul.mubr.f32.gmra.mrb[0].mxu0 %v1540
    %v1851 = vpop.f32.mrb[0].mxu0
    %v1852 = vadd.f32 0.0, %v1851
    %v1853 = vpop.f32.mrb[0].mxu0
    %1854 = vmatprep.mubr.f32.mxu0 0.0
    %1855 = vmatmul.mubr.f32.gmra.mrb[0].mxu0 %v1543
    %v1856 = vpop.f32.mrb[0].mxu0
    %v1857 = vadd.f32 0.0, %v1856
    %v1858 = vpop.f32.mrb[0].mxu0
    %1859 = vdwg.mxu0
    %1860 = vset.pattern.permute.xlu0 2
    %1861 = vperm.xlu0 %1860, %v1516
    %v1862 = vpop.permute.xlu0 %1861
    %1864 = vset.pattern.permute.xlu0 2
    %1865 = vperm.xlu0 %1864, %v1517
    %v1866 = vpop.permute.xlu0 %1865
    %1868 = vset.pattern.permute.xlu0 2
    %1869 = vperm.xlu0 %1868, %v1518
    %v1870 = vpop.permute.xlu0 %1869
    %1872 = vset.pattern.permute.xlu0 2
    %1873 = vperm.xlu0 %1872, %v1519
    %v1874 = vpop.permute.xlu0 %1873
    %v1876 = vmul.f32 %v1862, %v1842
    %v1877 = vmul.f32 %v1866, %v1847
    %v1878 = vmul.f32 %v1870, %v1852
    %v1879 = vmul.f32 %v1874, %v1857
    %v1880 = vadd.f32 %v1767, %v1876
    %v1881 = vadd.f32 %v1768, %v1877
    %v1882 = vadd.f32 %v1769, %v1878
    %v1883 = vadd.f32 %v1770, %v1879
    %v1884 = vld [vmem:[%s1528 + $0x60] sm:$0xff]
    %v1885 = vld [vmem:[%s1528 + $0x68] sm:$0xff]
    %v1886 = vld [vmem:[%s1528 + $0x70] sm:$0xff]
    %v1887 = vld [vmem:[%s1528 + $0x78] sm:$0xff]
    %1888 = vmatprep.subr.mxu0 0.0
    %1889 = vmatpush1.msra.mxu0 %v1884
    %1890 = vmatprep.subr.mxu0 0.0
    %1891 = vmatpush1.msra.mxu0 %v1885
    %1892 = vmatprep.subr.mxu0 0.0
    %1893 = vmatpush1.msra.mxu0 %v1886
    %1894 = vmatprep.subr.mxu0 0.0
    %1895 = vmatpush1.msra.mxu0 %v1887
    %1896 = vmatprep.subr.mxu0 0.0
    %1897 = vmatpush1.msra.mxu0 0.0
    %1898 = vmatprep.subr.mxu0 0.0
    %1899 = vmatpush1.msra.mxu0 0.0
    %1900 = vmatprep.subr.mxu0 0.0
    %1901 = vmatpush1.msra.mxu0 0.0
    %1902 = vmatprep.subr.mxu0 0.0
    %1903 = vmatpush1.msra.mxu0 0.0
    %1904 = vmatprep.subr.mxu0 0.0
    %1905 = vmatpush1.msra.mxu0 0.0
    %1906 = vmatprep.subr.mxu0 0.0
    %1907 = vmatpush1.msra.mxu0 0.0
    %1908 = vmatprep.subr.mxu0 0.0
    %1909 = vmatpush1.msra.mxu0 0.0
    %1910 = vmatprep.subr.mxu0 0.0
    %1911 = vmatpush1.msra.mxu0 0.0
    %1912 = vmatprep.subr.mxu0 0.0
    %1913 = vmatpush1.msra.mxu0 0.0
    %1914 = vmatprep.subr.mxu0 0.0
    %1915 = vmatpush1.msra.mxu0 0.0
    %1916 = vmatprep.subr.mxu0 0.0
    %1917 = vmatpush1.msra.mxu0 0.0
    %1918 = vmatprep.subr.mxu0 0.0
    %1919 = vmatpush1.msra.mxu0 0.0
    %1920 = vmatprep.subr.mxu0 0.0
    %1921 = vmatpush1.msra.mxu0 0.0
    %1922 = vmatprep.subr.mxu0 0.0
    %1923 = vmatpush1.msra.mxu0 0.0
    %1924 = vmatprep.subr.mxu0 0.0
    %1925 = vmatpush1.msra.mxu0 0.0
    %1926 = vmatprep.subr.mxu0 0.0
    %1927 = vmatpush1.msra.mxu0 0.0
    %1928 = vmatprep.subr.mxu0 0.0
    %1929 = vmatpush1.msra.mxu0 0.0
    %1930 = vmatprep.subr.mxu0 0.0
    %1931 = vmatpush1.msra.mxu0 0.0
    %1932 = vmatprep.subr.mxu0 0.0
    %1933 = vmatpush1.msra.mxu0 0.0
    %1934 = vmatprep.subr.mxu0 0.0
    %1935 = vmatpush1.msra.mxu0 0.0
    %1936 = vmatprep.subr.mxu0 0.0
    %1937 = vmatpush1.msra.mxu0 0.0
    %1938 = vmatprep.subr.mxu0 0.0
    %1939 = vmatpush1.msra.mxu0 0.0
    %1940 = vmatprep.subr.mxu0 0.0
    %1941 = vmatpush1.msra.mxu0 0.0
    %1942 = vmatprep.subr.mxu0 0.0
    %1943 = vmatpush1.msra.mxu0 0.0
    %1944 = vmatprep.subr.mxu0 0.0
    %1945 = vmatpush1.msra.mxu0 0.0
    %1946 = vmatprep.subr.mxu0 0.0
    %1947 = vmatpush1.msra.mxu0 0.0
    %1948 = vmatprep.subr.mxu0 0.0
    %1949 = vmatpush1.msra.mxu0 0.0
    %1950 = vmatprep.subr.mxu0 0.0
    %1951 = vmatpush1.msra.mxu0 0.0
    %1952 = vmatprep.mubr.f32.mxu0 0.0
    %1953 = vmatmul.mubr.f32.gmra.mrb[0].mxu0 %v1534
    %v1954 = vpop.f32.mrb[0].mxu0
    %v1955 = vadd.f32 0.0, %v1954
    %v1956 = vpop.f32.mrb[0].mxu0
    %1957 = vmatprep.mubr.f32.mxu0 0.0
    %1958 = vmatmul.mubr.f32.gmra.mrb[0].mxu0 %v1537
    %v1959 = vpop.f32.mrb[0].mxu0
    %v1960 = vadd.f32 0.0, %v1959
    %v1961 = vpop.f32.mrb[0].mxu0
    %1962 = vmatprep.mubr.f32.mxu0 0.0
    %1963 = vmatmul.mubr.f32.gmra.mrb[0].mxu0 %v1540
    %v1964 = vpop.f32.mrb[0].mxu0
    %v1965 = vadd.f32 0.0, %v1964
    %v1966 = vpop.f32.mrb[0].mxu0
    %1967 = vmatprep.mubr.f32.mxu0 0.0
    %1968 = vmatmul.mubr.f32.gmra.mrb[0].mxu0 %v1543
    %v1969 = vpop.f32.mrb[0].mxu0
    %v1970 = vadd.f32 0.0, %v1969
    %v1971 = vpop.f32.mrb[0].mxu0
    %1972 = vdwg.mxu0
    %1973 = vset.pattern.permute.xlu0 3
    %1974 = vperm.xlu0 %1973, %v1516
    %v1975 = vpop.permute.xlu0 %1974
    %1977 = vset.pattern.permute.xlu0 3
    %1978 = vperm.xlu0 %1977, %v1517
    %v1979 = vpop.permute.xlu0 %1978
    %1981 = vset.pattern.permute.xlu0 3
    %1982 = vperm.xlu0 %1981, %v1518
    %v1983 = vpop.permute.xlu0 %1982
    %1985 = vset.pattern.permute.xlu0 3
    %1986 = vperm.xlu0 %1985, %v1519
    %v1987 = vpop.permute.xlu0 %1986
    %v1989 = vmul.f32 %v1975, %v1955
    %v1990 = vmul.f32 %v1979, %v1960
    %v1991 = vmul.f32 %v1983, %v1965
    %v1992 = vmul.f32 %v1987, %v1970
    %v1993 = vadd.f32 %v1880, %v1989
    %v1994 = vadd.f32 %v1881, %v1990
    %v1995 = vadd.f32 %v1882, %v1991
    %v1996 = vadd.f32 %v1883, %v1992
    %v1997 = vmax.f32 %v1993, 0.0
    %v1998 = vmax.f32 %v1994, 0.0
    %v1999 = vmax.f32 %v1995, 0.0
    %v2000 = vmax.f32 %v1996, 0.0
    %v2001 = vadd.f32 %v1997, %v1998
    %v2002 = vadd.f32 %v2001, %v1999
    %v2003 = vadd.f32 %v2002, %v2000
    %v2004 = vmul.f32 %v2003, 0.25
    %s2005 = scalar_lea.vmem %s3, 256
    %v2006 = vld [vmem:[%s2005] sm:$0xff]
    %v2007 = vld [vmem:[%s2005 + $0x8] sm:$0xff]
    %v2008 = vld [vmem:[%s2005 + $0x10] sm:$0xff]
    %v2009 = vld [vmem:[%s2005 + $0x18] sm:$0xff]
    %s2010 = scalar_lea.vmem %s4, 2
    %v2011 = vld [vmem:[%s2010] sm:$0x1]
    %v2013 = vlaneseq
    %v2014 = vshrl.u32 %v2013, 7
    %v2015 = vsub.s32 0, %v2014
    %v2016 = vrot.slane %v2011, %v2015
    %v2019 = vsel %vm1417, %v2004, 0
    %2021 = vmatprep.subr.mxu0 0.0
    %2022 = vmatpush1.msra.mxu0 %v2006
    %2023 = vmatprep.subr.mxu0 0.0
    %2024 = vmatpush1.msra.mxu0 %v2007
    %2025 = vmatprep.subr.mxu0 0.0
    %2026 = vmatpush1.msra.mxu0 %v2008
    %2027 = vmatprep.subr.mxu0 0.0
    %2028 = vmatpush1.msra.mxu0 %v2009
    %2029 = vmatprep.subr.mxu0 0.0
    %2030 = vmatpush1.msra.mxu0 0.0
    %2031 = vmatprep.subr.mxu0 0.0
    %2032 = vmatpush1.msra.mxu0 0.0
    %2033 = vmatprep.subr.mxu0 0.0
    %2034 = vmatpush1.msra.mxu0 0.0
    %2035 = vmatprep.subr.mxu0 0.0
    %2036 = vmatpush1.msra.mxu0 0.0
    %2037 = vmatprep.subr.mxu0 0.0
    %2038 = vmatpush1.msra.mxu0 0.0
    %2039 = vmatprep.subr.mxu0 0.0
    %2040 = vmatpush1.msra.mxu0 0.0
    %2041 = vmatprep.subr.mxu0 0.0
    %2042 = vmatpush1.msra.mxu0 0.0
    %2043 = vmatprep.subr.mxu0 0.0
    %2044 = vmatpush1.msra.mxu0 0.0
    %2045 = vmatprep.subr.mxu0 0.0
    %2046 = vmatpush1.msra.mxu0 0.0
    %2047 = vmatprep.subr.mxu0 0.0
    %2048 = vmatpush1.msra.mxu0 0.0
    %2049 = vmatprep.subr.mxu0 0.0
    %2050 = vmatpush1.msra.mxu0 0.0
    %2051 = vmatprep.subr.mxu0 0.0
    %2052 = vmatpush1.msra.mxu0 0.0
    %2053 = vmatprep.subr.mxu0 0.0
    %2054 = vmatpush1.msra.mxu0 0.0
    %2055 = vmatprep.subr.mxu0 0.0
    %2056 = vmatpush1.msra.mxu0 0.0
    %2057 = vmatprep.subr.mxu0 0.0
    %2058 = vmatpush1.msra.mxu0 0.0
    %2059 = vmatprep.subr.mxu0 0.0
    %2060 = vmatpush1.msra.mxu0 0.0
    %2061 = vmatprep.subr.mxu0 0.0
    %2062 = vmatpush1.msra.mxu0 0.0
    %2063 = vmatprep.subr.mxu0 0.0
    %2064 = vmatpush1.msra.mxu0 0.0
    %2065 = vmatprep.subr.mxu0 0.0
    %2066 = vmatpush1.msra.mxu0 0.0
    %2067 = vmatprep.subr.mxu0 0.0
    %2068 = vmatpush1.msra.mxu0 0.0
    %2069 = vmatprep.subr.mxu0 0.0
    %2070 = vmatpush1.msra.mxu0 0.0
    %2071 = vmatprep.subr.mxu0 0.0
    %2072 = vmatpush1.msra.mxu0 0.0
    %2073 = vmatprep.subr.mxu0 0.0
    %2074 = vmatpush1.msra.mxu0 0.0
    %2075 = vmatprep.subr.mxu0 0.0
    %2076 = vmatpush1.msra.mxu0 0.0
    %2077 = vmatprep.subr.mxu0 0.0
    %2078 = vmatpush1.msra.mxu0 0.0
    %2079 = vmatprep.subr.mxu0 0.0
    %2080 = vmatpush1.msra.mxu0 0.0
    %2081 = vmatprep.subr.mxu0 0.0
    %2082 = vmatpush1.msra.mxu0 0.0
    %2083 = vmatprep.subr.mxu0 0.0
    %2084 = vmatpush1.msra.mxu0 0.0
    %2085 = vmatprep.mubr.f32.mxu0 0.0
    %2086 = vmatmul.mubr.f32.gmra.mrb[0].mxu0 %v2019
    %v2087 = vpop.f32.mrb[0].mxu0
    %v2088 = vadd.f32 %v2016, %v2087
    %v2089 = vpop.f32.mrb[0].mxu0
    %2090 = vdwg.mxu0
    %vm2091 = vcmask 64512
    %2092 = vst.msk [vmem:[#allocation2] sm:$0xff] %vm2091, %v2088
    // Predicated region
    $region22: #{tpu_custom_call.1} parent=1 // pred_check
      _
    $region23: #{tpu_custom_call.1} parent=1 // pred_check_branch
      %2094 = sbr.rel (0) target = $region25
    $region24: #{tpu_custom_call.1} parent=1 // pred_region
      %s2096 = ssub.s32 128, 128
      %2097 = vsyncadd [#allocation3], %s2096
      %s2099 = sshll.u32 [#allocation2], 4
      %s2100 = int_to_ptr.vmem [resolvable:$true] %s2099
      %2102 = dma.vmem_to_hbm [thread:$0]  %s2100, 128, %s5, [#allocation3]
    $region25: #{tpu_custom_call.1} parent=1 // pred_fallthru
      _
    // Predicated region
    $region26: #{tpu_custom_call.1} parent=1 // pred_check
      _
    $region27: #{tpu_custom_call.1} parent=1 // pred_check_branch
      %2104 = sbr.rel (0) target = $region29
    $region28: #{tpu_custom_call.1} parent=1 // pred_region
      %2105 = dma.done [#allocation3], 128
    $region29: #{tpu_custom_call.1} parent=1 // pred_fallthru
      _
    %2106 = vsyncpa [#allocation3], 1

</llo_original>
